<compile_context>
chip_gen: v7x
topology: tpu7x:2x2x1
jax: 0.10.0
libtpu: 0.0.40
codegen_flags: <defaults>
</compile_context>

<pallas_src>
import jax
import jax.numpy as jnp
from jax.experimental import pallas as pl
from jax.experimental.pallas import tpu as pltpu


# ----------------------------- helpers -------------------------------------

def _round_up(x, m):
    return ((x + m - 1) // m) * m


def _whole(shape):
    """BlockSpec covering the whole array (single grid point)."""
    nd = len(shape)
    return pl.BlockSpec(tuple(shape), lambda *_, _nd=nd: (0,) * _nd)


# ----------------------------- dense + ReLU ---------------------------------

def _dense_relu_kernel(x_ref, w_ref, b_ref, o_ref):
    h = jnp.dot(x_ref[...], w_ref[...], preferred_element_type=jnp.float32) + b_ref[...]
    o_ref[...] = jnp.maximum(h, 0.0)


def dense_relu(x, w, b, *, tm=256):
    """relu(x @ w + b); x [M,K], w [K,N], b [N]. Row-tiled, bf16 MXU operands."""
    M, K = x.shape
    N = w.shape[1]
    Mp = _round_up(M, 8)
    tm = min(tm, Mp)
    Mp = _round_up(Mp, tm)
    xp = x if Mp == M else jnp.pad(x, ((0, Mp - M), (0, 0)))
    out = pl.pallas_call(
        _dense_relu_kernel,
        out_shape=jax.ShapeDtypeStruct((Mp, N), jnp.float32),
        grid=(Mp // tm,),
        in_specs=[pl.BlockSpec((tm, K), lambda i: (i, 0)),
                  pl.BlockSpec((K, N), lambda i: (0, 0)),
                  pl.BlockSpec((1, N), lambda i: (0, 0))],
        out_specs=pl.BlockSpec((tm, N), lambda i: (i, 0)),
        compiler_params=pltpu.CompilerParams(
            dimension_semantics=("parallel",)),
    )(xp.astype(jnp.bfloat16), w.astype(jnp.bfloat16),
      b.reshape(1, N).astype(jnp.float32))
    return out[:M]


# ------------------- affine_transformation (masked mean-pool) ---------------

def _affine_pool_kernel(x_ref, w_ref, b_ref, sel_ref, o_ref):
    # relu(X @ Wt + b), then pooled via block-diagonal selection matmul (MXU, no
    # per-row stores / sublane reductions).  Output is a single lane-dense [B,H] tile.
    h = jnp.maximum(
        jnp.dot(x_ref[...], w_ref[...], preferred_element_type=jnp.float32)
        + b_ref[...], 0.0)
    o_ref[...] = jnp.dot(sel_ref[...], h, preferred_element_type=jnp.float32)


def affine_transformation(features, padding_mask, w_lin, b_lin):
    """features [B,L,H], padding_mask [B,L] -> [B,H] (matches torch affine_transformation)."""
    Bs, L, H = features.shape
    length = jnp.maximum(jnp.sum(padding_mask.astype(jnp.int32), axis=1) - 1, 1)   # [B]
    new_mask = (jnp.arange(L)[None, :] < length[:, None]).astype(jnp.float32)      # seq_len_to_mask
    scaled = new_mask / length[:, None].astype(jnp.float32)                        # mask / length
    eye = jnp.eye(Bs, dtype=jnp.float32)
    sel = (eye[:, :, None] * scaled[None, :, :]).reshape(Bs, Bs * L)               # block diagonal
    return pl.pallas_call(
        _affine_pool_kernel,
        out_shape=jax.ShapeDtypeStruct((Bs, H), jnp.float32),
        grid=(1,),
        in_specs=[_whole((Bs * L, H)), _whole((H, H)), _whole((1, H)),
                  _whole((Bs, Bs * L))],
        out_specs=_whole((Bs, H)),
    )(features.reshape(Bs * L, H).astype(jnp.bfloat16),
      w_lin.T.astype(jnp.bfloat16),
      b_lin.reshape(1, H).astype(jnp.float32),
      sel)


# --------------------- lm_head + cross-entropy (online LSE) ------------------

def _make_nll_kernel(ignore_index, tv, nb_v):
    def kernel(x_ref, w_ref, lab_ref, out_ref, m_ref, s_ref, g_ref):
        v = pl.program_id(1)

        @pl.when(v == 0)
        def _():
            m_ref[...] = jnp.full_like(m_ref, -jnp.inf)
            s_ref[...] = jnp.zeros_like(s_ref)
            g_ref[...] = jnp.zeros_like(g_ref)

        logits = jnp.dot(x_ref[...], w_ref[...],
                         preferred_element_type=jnp.float32)            # [tn, tv]
        lab = lab_ref[...]                                               # [tn, 1]
        col = jax.lax.broadcasted_iota(jnp.int32, logits.shape, 1) + v * tv
        onehot = (col == lab).astype(jnp.float32)
        g_ref[...] += jnp.sum(logits * onehot, axis=-1, keepdims=True)   # label logit

        m_old = m_ref[...]
        m_new = jnp.maximum(m_old, jnp.max(logits, axis=-1, keepdims=True))
        s_ref[...] = (s_ref[...] * jnp.exp(m_old - m_new)
                      + jnp.sum(jnp.exp(logits - m_new), axis=-1, keepdims=True))
        m_ref[...] = m_new

        @pl.when(v == nb_v - 1)
        def _():
            lse = m_ref[...] + jnp.log(s_ref[...])
            valid = (lab != ignore_index).astype(jnp.float32)
            per_tok = (lse - g_ref[...]) * valid
            loss_sum = jnp.sum(per_tok)
            valid_cnt = jnp.sum(valid)
            sub = jax.lax.broadcasted_iota(jnp.int32, (1, 8, 128), 1)
            lane = jax.lax.broadcasted_iota(jnp.int32, (1, 8, 128), 2)
            out_ref[...] = jnp.where((sub == 0) & (lane == 0), loss_sum,
                                     jnp.where((sub == 0) & (lane == 1), valid_cnt, 0.0))
    return kernel


def nll_loss(hidden, lm_head_w, labels, ignore_index):
    """CrossEntropyLoss(ignore_index) over lm_head(hidden); hidden [N,H], lm_head_w [V,H]."""
    N, H = hidden.shape
    V = lm_head_w.shape[0]
    Np = _round_up(N, 8)
    tn = min(256, Np)
    Np = _round_up(Np, tn)
    if Np != N:
        hidden = jnp.pad(hidden, ((0, Np - N), (0, 0)))
        labels = jnp.pad(labels, (0, Np - N), constant_values=ignore_index)
    tv = V
    for c in (2048, 1024, 512, 256, 128):           # V tile sized for v7x 64 MiB VMEM
        if V % c == 0:
            tv = c
            break
    nb_n, nb_v = Np // tn, V // tv

    partial = pl.pallas_call(
        _make_nll_kernel(int(ignore_index), tv, nb_v),
        out_shape=jax.ShapeDtypeStruct((nb_n, 8, 128), jnp.float32),
        grid=(nb_n, nb_v),
        in_specs=[pl.BlockSpec((tn, H), lambda n, v: (n, 0)),
                  pl.BlockSpec((H, tv), lambda n, v: (0, v)),
                  pl.BlockSpec((tn, 1), lambda n, v: (n, 0))],
        out_specs=pl.BlockSpec((1, 8, 128), lambda n, v: (n, 0, 0)),
        scratch_shapes=[pltpu.VMEM((tn, 1), jnp.float32),   # running max
                        pltpu.VMEM((tn, 1), jnp.float32),   # running sum-exp
                        pltpu.VMEM((tn, 1), jnp.float32)],  # label logit
        compiler_params=pltpu.CompilerParams(
            dimension_semantics=("parallel", "arbitrary"),
            vmem_limit_bytes=48 * 1024 * 1024),
    )(hidden.astype(jnp.bfloat16), lm_head_w.T.astype(jnp.bfloat16),
      labels.reshape(Np, 1).astype(jnp.int32))

    loss_sum = jnp.sum(partial[:, 0, 0])
    valid = jnp.sum(partial[:, 0, 1])
    return loss_sum / jnp.maximum(valid, 1.0)


# --------------------------- cosine similarity -------------------------------

def _cosine_kernel(e_ref, d_ref, o_ref):
    e = e_ref[0]                                                     # [1, H]
    d = d_ref[0]                                                     # [H, Mp]
    num = jnp.dot(e, d, preferred_element_type=jnp.float32)          # [1, Mp]
    en2 = jnp.sum(e * e)
    dn2 = jnp.sum(d * d, axis=0, keepdims=True)                      # [1, Mp]
    denom = jnp.maximum(jnp.sqrt(en2) * jnp.sqrt(dn2), 1e-8)
    o_ref[0] = num * pl.reciprocal(denom, approx=True)


def cosine_similarity(enc, dec):
    """torch.cosine_similarity(enc[:,None,:], dec, dim=-1); enc [B,H], dec [B,M,H] -> [B,M]."""
    B, M, H = dec.shape
    Mp = _round_up(M, 128)                    # lane-dense output, unmasked stores
    dec_t = jnp.transpose(dec, (0, 2, 1)).astype(jnp.float32)        # [B, H, M]
    if Mp != M:
        dec_t = jnp.pad(dec_t, ((0, 0), (0, 0), (0, Mp - M)))
    out = pl.pallas_call(
        _cosine_kernel,
        out_shape=jax.ShapeDtypeStruct((B, 1, Mp), jnp.float32),
        grid=(B,),
        in_specs=[pl.BlockSpec((1, 1, H), lambda b: (b, 0, 0)),
                  pl.BlockSpec((1, H, Mp), lambda b: (b, 0, 0))],
        out_specs=pl.BlockSpec((1, 1, Mp), lambda b: (b, 0, 0)),
        compiler_params=pltpu.CompilerParams(
            dimension_semantics=("parallel",)),
    )(enc.reshape(B, 1, H).astype(jnp.float32), dec_t)
    return out[:, 0, :M]


# ------------------------------- JAX glue ------------------------------------

def get_ngram(x, n):
    """x [B,C,L] float -> sliding n-grams [B,C,L-n+1,n] (== torch masked_select path)."""
    B, C, L = x.shape
    clipped = L - n + 1
    return jnp.stack([x[:, :, i:i + clipped] for i in range(n)], axis=-1)


def oracle_function(references, predicted, pad_id, n_gram):
    n = min(n_gram, references.shape[-1], predicted.shape[-1])
    C = predicted.shape[1]
    ref_pad = (references != pad_id).astype(jnp.float32)                 # [B,Lr]
    Lr = ref_pad.shape[1]
    ref_pos = jnp.arange(Lr, dtype=jnp.float32)[None, :] * jnp.ones_like(ref_pad)
    ref_mask = jnp.where(ref_pos < jnp.sum(ref_pad, axis=-1, keepdims=True) - n + 1,
                         ref_pad, jnp.zeros_like(ref_pad))[:, :Lr - n + 1]
    pred_pad = (predicted != pad_id).astype(jnp.float32)                 # [B,C,Lp]
    Lp = pred_pad.shape[-1]
    pred_pos = jnp.arange(Lp, dtype=jnp.float32)[None, None, :] * jnp.ones_like(pred_pad)
    pred_mask = jnp.where(pred_pos < jnp.sum(pred_pad, axis=-1, keepdims=True) - n + 1,
                          pred_pad, jnp.zeros_like(pred_pad))[:, :, :Lp - n + 1]
    refs = references.astype(jnp.float32) * ref_pad
    preds = predicted.astype(jnp.float32) * pred_pad
    refs = jnp.broadcast_to(refs[:, None, :], (refs.shape[0], C, Lr))
    ref_ngram = get_ngram(refs, n)                                       # [B,C,Pr,n]
    pred_ngram = get_ngram(preds, n)                                     # [B,C,Pp,n]
    diff = pred_ngram[:, :, :, None, :] - ref_ngram[:, :, None, :, :]
    sim = (jnp.sqrt(jnp.sum(diff * diff, axis=-1)) == 0.0).astype(jnp.float32)
    sim = sim * pred_mask[:, :, :, None] * ref_mask[:, None, None, :]
    sim = jnp.sum(jnp.max(sim, axis=-1), axis=-1)                        # [B,C]
    ref_len = jnp.sum(ref_pad, axis=-1, keepdims=True)                   # [B,1]
    pre_len = jnp.sum(pred_pad, axis=-1)                                 # [B,C]
    brevity = jnp.exp(1.0 - ref_len / jnp.maximum(pre_len, 1.0))
    brevity = jnp.where(ref_len >= pre_len, brevity, jnp.ones_like(brevity))
    denom = jnp.maximum(jnp.sum(pred_mask, axis=-1), 1.0)
    return sim / denom * brevity


def ranking_loss(cos_distance, oracle_distance):
    margin = 0.01
    total = jnp.zeros((), jnp.float32)          # MarginRankingLoss(0)(x, x, 1) == 0
    n = cos_distance.shape[1]
    for i in range(1, n):
        pos = cos_distance[:, :-i]
        neg = cos_distance[:, i:]
        same_mask = (jnp.abs(oracle_distance[:, :-i] - oracle_distance[:, i:]) > margin
                     ).astype(jnp.float32)
        marginal = jnp.maximum(0.0, -(pos - neg) + margin * i)
        sm = jnp.sum(same_mask)
        total = total + jnp.where(sm > 0,
                                  jnp.sum(marginal * same_mask) / jnp.maximum(sm, 1.0),
                                  0.0)
    return total


# --------------------------- surrogate T5 pieces -----------------------------

def init_params(key, vocab, hidden):
    ks = jax.random.split(key, 6)
    scale = 0.02
    bound = (6.0 / (hidden + hidden)) ** 0.5    # xavier_uniform for linear_layer
    return dict(
        emb=jax.random.normal(ks[0], (vocab, hidden), jnp.float32) * scale,
        enc_w=jax.random.normal(ks[1], (hidden, hidden), jnp.float32) * scale,
        enc_b=jnp.zeros((hidden,), jnp.float32),
        dec_w=jax.random.normal(ks[2], (hidden, hidden), jnp.float32) * scale,
        dec_b=jnp.zeros((hidden,), jnp.float32),
        lin_w=jax.random.uniform(ks[3], (hidden, hidden), jnp.float32, -bound, bound),
        lin_b=jnp.zeros((hidden,), jnp.float32),
        lm_w=jax.random.normal(ks[4], (vocab, hidden), jnp.float32) * scale,
    )


def run_encoder(params, ids):
    # TODO(synk): full pretrained T5 encoder stack has no Pallas translation; surrogate = embedding + Pallas dense+ReLU.
    B, S = ids.shape
    H = params['emb'].shape[1]
    x = params['emb'][ids]                                   # [B,S,H]
    h = dense_relu(x.reshape(B * S, H), params['enc_w'], params['enc_b'])
    return h.reshape(B, S, H)


def run_decoder(params, ids, enc_ctx):
    # TODO(synk): full T5 decoder (self/cross-attention) not translated; surrogate = embedding + pooled encoder context + Pallas dense+ReLU.
    Bs, T = ids.shape
    H = params['emb'].shape[1]
    x = params['emb'][ids] + enc_ctx                         # enc_ctx [Bs,1,H]
    h = dense_relu(x.reshape(Bs * T, H), params['dec_w'], params['dec_b'])
    return h.reshape(Bs, T, H)


# ------------------------------- forward --------------------------------------

def model_forward(params, args, src_inp, target_inp, target_outp, candidates):
    pad_id = args['pad_id']
    B = args['batch_size']
    H = params['emb'].shape[1]

    src_mask = src_inp != pad_id

    encoder_state = run_encoder(params, src_inp)
    enc_ctx = jnp.mean(encoder_state, axis=1, keepdims=True)            # [B,1,H]
    decoder_state = run_decoder(params, target_inp, enc_ctx)
    decoder_last = decoder_state * (H ** -0.5)                          # model_name == 't5-small'

    nll = nll_loss(decoder_last.reshape(-1, H), params['lm_w'],
                   target_outp.reshape(-1), args['ignore_index'])

    # TODO(synk): generator.generate() diverse beam search has no Pallas equivalent; `candidates` is a deterministic stand-in.
    cand_len = candidates.shape[2]
    in_batch = jnp.broadcast_to(target_inp[None, :, :], (B, B, target_inp.shape[1]))
    if target_inp.shape[1] < cand_len:                                   # pad2_len
        pad = jnp.full((B, B, cand_len - target_inp.shape[1]), pad_id, jnp.int32)
        in_batch = jnp.concatenate([in_batch, pad], axis=-1)
    else:
        in_batch = in_batch[:, :, :cand_len]
    all_samples = jnp.concatenate([candidates, in_batch], axis=1)        # [B, K+B, L]

    oracle = oracle_function(target_inp, all_samples, pad_id, args['n_gram'])
    oracle_masked = oracle * (oracle < 0.99).astype(jnp.float32)
    actual_indices = jnp.argsort(-oracle_masked, axis=-1)
    oracle_sorted = jnp.take_along_axis(oracle_masked, actual_indices, axis=-1)

    if args['max_sample_num']:
        sample_num = min(args['max_sample_num'] - 1, oracle_masked.shape[1] - 1)
    else:
        sample_num = oracle_masked.shape[1] - 1

    sampled_oracle = oracle_sorted[:, :sample_num]
    sampled_idx = actual_indices[:, :sample_num]
    gold_idx = (jnp.arange(B).reshape(B, 1) + candidates.shape[1]).astype(sampled_idx.dtype)
    sampled_indices = jnp.concatenate([gold_idx, sampled_idx], axis=-1)   # [B, S_num]
    gold_distance = jnp.full((B, 1), 1.0, jnp.float32)
    sampled_bleu = jnp.concatenate([gold_distance, sampled_oracle], axis=-1)

    S_num = sampled_indices.shape[1]
    temp_idx = jnp.broadcast_to(sampled_indices[:, :, None], (B, S_num, cand_len))
    sampled_input = jnp.take_along_axis(all_samples, temp_idx, axis=1)    # [B,S_num,L]

    # --- batched candidate decoding: one decoder + one pooling call ----------
    ids_flat = sampled_input.reshape(B * S_num, cand_len)
    m_flat = (ids_flat != pad_id).at[:, 0].set(True)
    ctx_flat = jnp.broadcast_to(enc_ctx[:, None, :, :], (B, S_num, 1, H)
                                ).reshape(B * S_num, 1, H)
    dec_out = run_decoder(params, ids_flat, ctx_flat)                     # [B*S_num,L,H]
    dec_feat = affine_transformation(dec_out, m_flat,
                                     params['lin_w'], params['lin_b'])    # [B*S_num,H]
    decoder_feature = dec_feat.reshape(B, S_num, H)

    encoder_feature = affine_transformation(encoder_state, src_mask,
                                            params['lin_w'], params['lin_b'])
    cos = cosine_similarity(encoder_feature, decoder_feature)             # [B,S_num]
    cl = ranking_loss(cos, sampled_bleu)
    return {'loss': nll + cl, 'cl_loss': cl}


# --------------------------------- main ----------------------------------------

if __name__ == "__main__":
    args = dict(model_name='t5-small', pad_id=0, ignore_index=0, n_gram=2,
                batch_size=2, train_beam_size=2, max_sample_num=4)
    B, S, T, H, V, K = 2, 16, 16, 128, 256, 2
    cand_len = 12

    key = jax.random.PRNGKey(0)
    k_par, k_src, k_tgt, k_out, k_cand = jax.random.split(key, 5)
    params = init_params(k_par, V, H)

    src_inp = jax.random.randint(k_src, (B, S), 1, V, jnp.int32)
    src_inp = src_inp.at[0, -3:].set(0).at[1, -5:].set(0)
    target_inp = jax.random.randint(k_tgt, (B, T), 1, V, jnp.int32)
    target_inp = target_inp.at[:, -2:].set(0)
    target_outp = jax.random.randint(k_out, (B, T), 1, V, jnp.int32)
    target_outp = target_outp.at[:, -2:].set(0)
    candidates = jax.random.randint(k_cand, (B, K, cand_len), 1, V, jnp.int32)
    candidates = candidates.at[:, 0, -2:].set(0)          # some padded candidates

    fwd = jax.jit(lambda s, ti, to, c: model_forward(params, args, s, ti, to, c))
    out = fwd(src_inp, target_inp, target_outp, candidates)
    jax.block_until_ready(out['loss'])
    assert bool(jnp.isfinite(out['loss'])) and bool(jnp.isfinite(out['cl_loss']))
    print("KERNEL_OK")
</pallas_src>

<mosaic_0001>
module attributes {stable_mosaic.version = 11 : i64} {
  func.func @_affine_pool_kernel(%arg0: i32, %arg1: memref<32x128xbf16, #tpu.memory_space<vmem>>, %arg2: memref<128x128xbf16, #tpu.memory_space<vmem>>, %arg3: memref<1x128xf32, #tpu.memory_space<vmem>>, %arg4: memref<2x32xf32, #tpu.memory_space<vmem>>, %arg5: memref<2x128xf32, #tpu.memory_space<vmem>>) attributes {dimension_semantics = [#tpu.dimension_semantics<arbitrary>], iteration_bounds = array<i64: 1>, scalar_prefetch = 0 : i64, scratch_operands = 0 : i64, tpu.core_type = #tpu.core_type<tc>, window_params = [{pipeline_mode = #tpu.pipeline_mode<synchronous>, transform_indices = @transform_0, window_bounds = array<i64: 32, 128>}, {pipeline_mode = #tpu.pipeline_mode<synchronous>, transform_indices = @transform_1, window_bounds = array<i64: 128, 128>}, {pipeline_mode = #tpu.pipeline_mode<synchronous>, transform_indices = @transform_2, window_bounds = array<i64: 1, 128>}, {pipeline_mode = #tpu.pipeline_mode<synchronous>, transform_indices = @transform_3, window_bounds = array<i64: 2, 32>}, {pipeline_mode = #tpu.pipeline_mode<synchronous>, transform_indices = @transform_4, window_bounds = array<i64: 2, 128>}]} {
    %c0 = arith.constant 0 : index
    %c0_0 = arith.constant 0 : index
    %0 = vector.load %arg1[%c0, %c0_0] : memref<32x128xbf16, #tpu.memory_space<vmem>>, vector<32x128xbf16>
    %c0_1 = arith.constant 0 : index
    %c0_2 = arith.constant 0 : index
    %1 = vector.load %arg2[%c0_1, %c0_2] : memref<128x128xbf16, #tpu.memory_space<vmem>>, vector<128x128xbf16>
    %cst = arith.constant dense<0.000000e+00> : vector<32x128xf32>
    %2 = tpu.matmul %0, %1, %cst {dimension_numbers = #tpu.dot_dimension_numbers<[1], [0], [0], [1], [0, 0, 1, 1], [], []>} : vector<32x128xbf16>, vector<128x128xbf16>, vector<32x128xf32> -> vector<32x128xf32>
    %c0_3 = arith.constant 0 : index
    %c0_4 = arith.constant 0 : index
    %3 = vector.load %arg3[%c0_3, %c0_4] : memref<1x128xf32, #tpu.memory_space<vmem>>, vector<1x128xf32>
    %4 = vector.broadcast %3 : vector<1x128xf32> to vector<32x128xf32>
    %5 = arith.addf %2, %4 : vector<32x128xf32>
    %cst_5 = arith.constant 0.000000e+00 : f32
    %6 = vector.broadcast %cst_5 : f32 to vector<32x128xf32>
    %7 = arith.maximumf %5, %6 : vector<32x128xf32>
    %c0_6 = arith.constant 0 : index
    %c0_7 = arith.constant 0 : index
    %8 = vector.load %arg4[%c0_6, %c0_7] : memref<2x32xf32, #tpu.memory_space<vmem>>, vector<2x32xf32>
    %cst_8 = arith.constant dense<0.000000e+00> : vector<2x128xf32>
    %9 = tpu.matmul %8, %7, %cst_8 {dimension_numbers = #tpu.dot_dimension_numbers<[1], [0], [0], [1], [0, 0, 1, 1], [], []>} : vector<2x32xf32>, vector<32x128xf32>, vector<2x128xf32> -> vector<2x128xf32>
    %c0_9 = arith.constant 0 : index
    %c0_10 = arith.constant 0 : index
    %10 = vector.load %arg5[%c0_9, %c0_10] : memref<2x128xf32, #tpu.memory_space<vmem>>, vector<2x128xf32>
    tpu.vector_store %arg5[%c0_9, %c0_10], %9 {strides = array<i32>} : memref<2x128xf32, #tpu.memory_space<vmem>>, vector<2x128xf32>,
    return
  }
  func.func @transform_0(%arg0: i32) -> (i32, i32) {
    %c0_i32 = arith.constant 0 : i32
    %c0_i32_0 = arith.constant 0 : i32
    %c0_i32_1 = arith.constant 0 : i32
    return %c0_i32, %c0_i32_0 : i32, i32
  }
  func.func @transform_1(%arg0: i32) -> (i32, i32) {
    %c0_i32 = arith.constant 0 : i32
    %c0_i32_0 = arith.constant 0 : i32
    %c0_i32_1 = arith.constant 0 : i32
    return %c0_i32, %c0_i32_0 : i32, i32
  }
  func.func @transform_2(%arg0: i32) -> (i32, i32) {
    %c0_i32 = arith.constant 0 : i32
    %c0_i32_0 = arith.constant 0 : i32
    %c0_i32_1 = arith.constant 0 : i32
    return %c0_i32, %c0_i32_0 : i32, i32
  }
  func.func @transform_3(%arg0: i32) -> (i32, i32) {
    %c0_i32 = arith.constant 0 : i32
    %c0_i32_0 = arith.constant 0 : i32
    %c0_i32_1 = arith.constant 0 : i32
    return %c0_i32, %c0_i32_0 : i32, i32
  }
  func.func @transform_4(%arg0: i32) -> (i32, i32) {
    %c0_i32 = arith.constant 0 : i32
    %c0_i32_0 = arith.constant 0 : i32
    %c0_i32_1 = arith.constant 0 : i32
    return %c0_i32, %c0_i32_0 : i32, i32
  }
}

module attributes {stable_mosaic.version = 11 : i64} {
  func.func @_dense_relu_kernel(%arg0: i32, %arg1: memref<32x128xbf16, #tpu.memory_space<vmem>>, %arg2: memref<128x128xbf16, #tpu.memory_space<vmem>>, %arg3: memref<1x128xf32, #tpu.memory_space<vmem>>, %arg4: memref<32x128xf32, #tpu.memory_space<vmem>>) attributes {dimension_semantics = [#tpu.dimension_semantics<parallel>], iteration_bounds = array<i64: 1>, scalar_prefetch = 0 : i64, scratch_operands = 0 : i64, tpu.core_type = #tpu.core_type<tc>, window_params = [{transform_indices = @transform_0, window_bounds = array<i64: 32, 128>}, {pipeline_mode = #tpu.pipeline_mode<synchronous>, transform_indices = @transform_1, window_bounds = array<i64: 128, 128>}, {pipeline_mode = #tpu.pipeline_mode<synchronous>, transform_indices = @transform_2, window_bounds = array<i64: 1, 128>}, {transform_indices = @transform_3, window_bounds = array<i64: 32, 128>}]} {
    %c0 = arith.constant 0 : index
    %c0_0 = arith.constant 0 : index
    %0 = vector.load %arg1[%c0, %c0_0] : memref<32x128xbf16, #tpu.memory_space<vmem>>, vector<32x128xbf16>
    %c0_1 = arith.constant 0 : index
    %c0_2 = arith.constant 0 : index
    %1 = vector.load %arg2[%c0_1, %c0_2] : memref<128x128xbf16, #tpu.memory_space<vmem>>, vector<128x128xbf16>
    %cst = arith.constant dense<0.000000e+00> : vector<32x128xf32>
    %2 = tpu.matmul %0, %1, %cst {dimension_numbers = #tpu.dot_dimension_numbers<[1], [0], [0], [1], [0, 0, 1, 1], [], []>} : vector<32x128xbf16>, vector<128x128xbf16>, vector<32x128xf32> -> vector<32x128xf32>
    %c0_3 = arith.constant 0 : index
    %c0_4 = arith.constant 0 : index
    %3 = vector.load %arg3[%c0_3, %c0_4] : memref<1x128xf32, #tpu.memory_space<vmem>>, vector<1x128xf32>
    %4 = vector.broadcast %3 : vector<1x128xf32> to vector<32x128xf32>
    %5 = arith.addf %2, %4 : vector<32x128xf32>
    %cst_5 = arith.constant 0.000000e+00 : f32
    %6 = vector.broadcast %cst_5 : f32 to vector<32x128xf32>
    %7 = arith.maximumf %5, %6 : vector<32x128xf32>
    %c0_6 = arith.constant 0 : index
    %c0_7 = arith.constant 0 : index
    %8 = vector.load %arg4[%c0_6, %c0_7] : memref<32x128xf32, #tpu.memory_space<vmem>>, vector<32x128xf32>
    tpu.vector_store %arg4[%c0_6, %c0_7], %7 {strides = array<i32>} : memref<32x128xf32, #tpu.memory_space<vmem>>, vector<32x128xf32>,
    return
  }
  func.func @transform_0(%arg0: i32) -> (i32, i32) {
    %c0_i32 = arith.constant 0 : i32
    %c0_i32_0 = arith.constant 0 : i32
    return %arg0, %c0_i32 : i32, i32
  }
  func.func @transform_1(%arg0: i32) -> (i32, i32) {
    %c0_i32 = arith.constant 0 : i32
    %c0_i32_0 = arith.constant 0 : i32
    %c0_i32_1 = arith.constant 0 : i32
    return %c0_i32, %c0_i32_0 : i32, i32
  }
  func.func @transform_2(%arg0: i32) -> (i32, i32) {
    %c0_i32 = arith.constant 0 : i32
    %c0_i32_0 = arith.constant 0 : i32
    %c0_i32_1 = arith.constant 0 : i32
    return %c0_i32, %c0_i32_0 : i32, i32
  }
  func.func @transform_3(%arg0: i32) -> (i32, i32) {
    %c0_i32 = arith.constant 0 : i32
    %c0_i32_0 = arith.constant 0 : i32
    return %arg0, %c0_i32 : i32, i32
  }
}

module attributes {stable_mosaic.version = 11 : i64} {
  func.func @_dense_relu_kernel(%arg0: i32, %arg1: memref<96x128xbf16, #tpu.memory_space<vmem>>, %arg2: memref<128x128xbf16, #tpu.memory_space<vmem>>, %arg3: memref<1x128xf32, #tpu.memory_space<vmem>>, %arg4: memref<96x128xf32, #tpu.memory_space<vmem>>) attributes {dimension_semantics = [#tpu.dimension_semantics<parallel>], iteration_bounds = array<i64: 1>, scalar_prefetch = 0 : i64, scratch_operands = 0 : i64, tpu.core_type = #tpu.core_type<tc>, window_params = [{transform_indices = @transform_0, window_bounds = array<i64: 96, 128>}, {pipeline_mode = #tpu.pipeline_mode<synchronous>, transform_indices = @transform_1, window_bounds = array<i64: 128, 128>}, {pipeline_mode = #tpu.pipeline_mode<synchronous>, transform_indices = @transform_2, window_bounds = array<i64: 1, 128>}, {transform_indices = @transform_3, window_bounds = array<i64: 96, 128>}]} {
    %c0 = arith.constant 0 : index
    %c0_0 = arith.constant 0 : index
    %0 = vector.load %arg1[%c0, %c0_0] : memref<96x128xbf16, #tpu.memory_space<vmem>>, vector<96x128xbf16>
    %c0_1 = arith.constant 0 : index
    %c0_2 = arith.constant 0 : index
    %1 = vector.load %arg2[%c0_1, %c0_2] : memref<128x128xbf16, #tpu.memory_space<vmem>>, vector<128x128xbf16>
    %cst = arith.constant dense<0.000000e+00> : vector<96x128xf32>
    %2 = tpu.matmul %0, %1, %cst {dimension_numbers = #tpu.dot_dimension_numbers<[1], [0], [0], [1], [0, 0, 1, 1], [], []>} : vector<96x128xbf16>, vector<128x128xbf16>, vector<96x128xf32> -> vector<96x128xf32>
    %c0_3 = arith.constant 0 : index
    %c0_4 = arith.constant 0 : index
    %3 = vector.load %arg3[%c0_3, %c0_4] : memref<1x128xf32, #tpu.memory_space<vmem>>, vector<1x128xf32>
    %4 = vector.broadcast %3 : vector<1x128xf32> to vector<96x128xf32>
    %5 = arith.addf %2, %4 : vector<96x128xf32>
    %cst_5 = arith.constant 0.000000e+00 : f32
    %6 = vector.broadcast %cst_5 : f32 to vector<96x128xf32>
    %7 = arith.maximumf %5, %6 : vector<96x128xf32>
    %c0_6 = arith.constant 0 : index
    %c0_7 = arith.constant 0 : index
    %8 = vector.load %arg4[%c0_6, %c0_7] : memref<96x128xf32, #tpu.memory_space<vmem>>, vector<96x128xf32>
    tpu.vector_store %arg4[%c0_6, %c0_7], %7 {strides = array<i32>} : memref<96x128xf32, #tpu.memory_space<vmem>>, vector<96x128xf32>,
    return
  }
  func.func @transform_0(%arg0: i32) -> (i32, i32) {
    %c0_i32 = arith.constant 0 : i32
    %c0_i32_0 = arith.constant 0 : i32
    return %arg0, %c0_i32 : i32, i32
  }
  func.func @transform_1(%arg0: i32) -> (i32, i32) {
    %c0_i32 = arith.constant 0 : i32
    %c0_i32_0 = arith.constant 0 : i32
    %c0_i32_1 = arith.constant 0 : i32
    return %c0_i32, %c0_i32_0 : i32, i32
  }
  func.func @transform_2(%arg0: i32) -> (i32, i32) {
    %c0_i32 = arith.constant 0 : i32
    %c0_i32_0 = arith.constant 0 : i32
    %c0_i32_1 = arith.constant 0 : i32
    return %c0_i32, %c0_i32_0 : i32, i32
  }
  func.func @transform_3(%arg0: i32) -> (i32, i32) {
    %c0_i32 = arith.constant 0 : i32
    %c0_i32_0 = arith.constant 0 : i32
    return %arg0, %c0_i32 : i32, i32
  }
}

module attributes {stable_mosaic.version = 11 : i64} {
  func.func @_affine_pool_kernel(%arg0: i32, %arg1: memref<96x128xbf16, #tpu.memory_space<vmem>>, %arg2: memref<128x128xbf16, #tpu.memory_space<vmem>>, %arg3: memref<1x128xf32, #tpu.memory_space<vmem>>, %arg4: memref<8x96xf32, #tpu.memory_space<vmem>>, %arg5: memref<8x128xf32, #tpu.memory_space<vmem>>) attributes {dimension_semantics = [#tpu.dimension_semantics<arbitrary>], iteration_bounds = array<i64: 1>, scalar_prefetch = 0 : i64, scratch_operands = 0 : i64, tpu.core_type = #tpu.core_type<tc>, window_params = [{pipeline_mode = #tpu.pipeline_mode<synchronous>, transform_indices = @transform_0, window_bounds = array<i64: 96, 128>}, {pipeline_mode = #tpu.pipeline_mode<synchronous>, transform_indices = @transform_1, window_bounds = array<i64: 128, 128>}, {pipeline_mode = #tpu.pipeline_mode<synchronous>, transform_indices = @transform_2, window_bounds = array<i64: 1, 128>}, {pipeline_mode = #tpu.pipeline_mode<synchronous>, transform_indices = @transform_3, window_bounds = array<i64: 8, 96>}, {pipeline_mode = #tpu.pipeline_mode<synchronous>, transform_indices = @transform_4, window_bounds = array<i64: 8, 128>}]} {
    %c0 = arith.constant 0 : index
    %c0_0 = arith.constant 0 : index
    %0 = vector.load %arg1[%c0, %c0_0] : memref<96x128xbf16, #tpu.memory_space<vmem>>, vector<96x128xbf16>
    %c0_1 = arith.constant 0 : index
    %c0_2 = arith.constant 0 : index
    %1 = vector.load %arg2[%c0_1, %c0_2] : memref<128x128xbf16, #tpu.memory_space<vmem>>, vector<128x128xbf16>
    %cst = arith.constant dense<0.000000e+00> : vector<96x128xf32>
    %2 = tpu.matmul %0, %1, %cst {dimension_numbers = #tpu.dot_dimension_numbers<[1], [0], [0], [1], [0, 0, 1, 1], [], []>} : vector<96x128xbf16>, vector<128x128xbf16>, vector<96x128xf32> -> vector<96x128xf32>
    %c0_3 = arith.constant 0 : index
    %c0_4 = arith.constant 0 : index
    %3 = vector.load %arg3[%c0_3, %c0_4] : memref<1x128xf32, #tpu.memory_space<vmem>>, vector<1x128xf32>
    %4 = vector.broadcast %3 : vector<1x128xf32> to vector<96x128xf32>
    %5 = arith.addf %2, %4 : vector<96x128xf32>
    %cst_5 = arith.constant 0.000000e+00 : f32
    %6 = vector.broadcast %cst_5 : f32 to vector<96x128xf32>
    %7 = arith.maximumf %5, %6 : vector<96x128xf32>
    %c0_6 = arith.constant 0 : index
    %c0_7 = arith.constant 0 : index
    %8 = vector.load %arg4[%c0_6, %c0_7] : memref<8x96xf32, #tpu.memory_space<vmem>>, vector<8x96xf32>
    %cst_8 = arith.constant dense<0.000000e+00> : vector<8x128xf32>
    %9 = tpu.matmul %8, %7, %cst_8 {dimension_numbers = #tpu.dot_dimension_numbers<[1], [0], [0], [1], [0, 0, 1, 1], [], []>} : vector<8x96xf32>, vector<96x128xf32>, vector<8x128xf32> -> vector<8x128xf32>
    %c0_9 = arith.constant 0 : index
    %c0_10 = arith.constant 0 : index
    %10 = vector.load %arg5[%c0_9, %c0_10] : memref<8x128xf32, #tpu.memory_space<vmem>>, vector<8x128xf32>
    tpu.vector_store %arg5[%c0_9, %c0_10], %9 {strides = array<i32>} : memref<8x128xf32, #tpu.memory_space<vmem>>, vector<8x128xf32>,
    return
  }
  func.func @transform_0(%arg0: i32) -> (i32, i32) {
    %c0_i32 = arith.constant 0 : i32
    %c0_i32_0 = arith.constant 0 : i32
    %c0_i32_1 = arith.constant 0 : i32
    return %c0_i32, %c0_i32_0 : i32, i32
  }
  func.func @transform_1(%arg0: i32) -> (i32, i32) {
    %c0_i32 = arith.constant 0 : i32
    %c0_i32_0 = arith.constant 0 : i32
    %c0_i32_1 = arith.constant 0 : i32
    return %c0_i32, %c0_i32_0 : i32, i32
  }
  func.func @transform_2(%arg0: i32) -> (i32, i32) {
    %c0_i32 = arith.constant 0 : i32
    %c0_i32_0 = arith.constant 0 : i32
    %c0_i32_1 = arith.constant 0 : i32
    return %c0_i32, %c0_i32_0 : i32, i32
  }
  func.func @transform_3(%arg0: i32) -> (i32, i32) {
    %c0_i32 = arith.constant 0 : i32
    %c0_i32_0 = arith.constant 0 : i32
    %c0_i32_1 = arith.constant 0 : i32
    return %c0_i32, %c0_i32_0 : i32, i32
  }
  func.func @transform_4(%arg0: i32) -> (i32, i32) {
    %c0_i32 = arith.constant 0 : i32
    %c0_i32_0 = arith.constant 0 : i32
    %c0_i32_1 = arith.constant 0 : i32
    return %c0_i32, %c0_i32_0 : i32, i32
  }
}

module attributes {stable_mosaic.version = 11 : i64} {
  func.func @kernel(%arg0: i32, %arg1: i32, %arg2: memref<32x128xbf16, #tpu.memory_space<vmem>>, %arg3: memref<128x256xbf16, #tpu.memory_space<vmem>>, %arg4: memref<32x1xi32, #tpu.memory_space<vmem>>, %arg5: memref<1x8x128xf32, #tpu.memory_space<vmem>>, %arg6: memref<32x1xf32, #tpu.memory_space<vmem>>, %arg7: memref<32x1xf32, #tpu.memory_space<vmem>>, %arg8: memref<32x1xf32, #tpu.memory_space<vmem>>) attributes {dimension_semantics = [#tpu.dimension_semantics<parallel>, #tpu.dimension_semantics<arbitrary>], iteration_bounds = array<i64: 1, 1>, scalar_prefetch = 0 : i64, scratch_operands = 3 : i64, tpu.core_type = #tpu.core_type<tc>, window_params = [{transform_indices = @transform_0, window_bounds = array<i64: 32, 128>}, {transform_indices = @transform_1, window_bounds = array<i64: 128, 256>}, {transform_indices = @transform_2, window_bounds = array<i64: 32, 1>}, {transform_indices = @transform_3, window_bounds = array<i64: 1, 8, 128>}]} {
    %c0_i32 = arith.constant 0 : i32
    %0 = arith.cmpi eq, %arg1, %c0_i32 : i32
    %1 = arith.extui %0 : i1 to i32
    %c0_i32_0 = arith.constant 0 : i32
    %2 = arith.cmpi ne, %1, %c0_i32_0 : i32
    scf.if %2 {
      %cst_23 = arith.constant 0xFF800000 : f32
      %40 = vector.broadcast %cst_23 : f32 to vector<32x1xf32>
      %c0_24 = arith.constant 0 : index
      %c0_25 = arith.constant 0 : index
      %41 = vector.load %arg6[%c0_24, %c0_25] : memref<32x1xf32, #tpu.memory_space<vmem>>, vector<32x1xf32>
      tpu.vector_store %arg6[%c0_24, %c0_25], %40 {strides = array<i32>} : memref<32x1xf32, #tpu.memory_space<vmem>>, vector<32x1xf32>,
      %cst_26 = arith.constant 0.000000e+00 : f32
      %42 = vector.broadcast %cst_26 : f32 to vector<32x1xf32>
      %c0_27 = arith.constant 0 : index
      %c0_28 = arith.constant 0 : index
      %43 = vector.load %arg7[%c0_27, %c0_28] : memref<32x1xf32, #tpu.memory_space<vmem>>, vector<32x1xf32>
      tpu.vector_store %arg7[%c0_27, %c0_28], %42 {strides = array<i32>} : memref<32x1xf32, #tpu.memory_space<vmem>>, vector<32x1xf32>,
      %cst_29 = arith.constant 0.000000e+00 : f32
      %44 = vector.broadcast %cst_29 : f32 to vector<32x1xf32>
      %c0_30 = arith.constant 0 : index
      %c0_31 = arith.constant 0 : index
      %45 = vector.load %arg8[%c0_30, %c0_31] : memref<32x1xf32, #tpu.memory_space<vmem>>, vector<32x1xf32>
      tpu.vector_store %arg8[%c0_30, %c0_31], %44 {strides = array<i32>} : memref<32x1xf32, #tpu.memory_space<vmem>>, vector<32x1xf32>,
    } else {
    }
    %c0 = arith.constant 0 : index
    %c0_1 = arith.constant 0 : index
    %3 = vector.load %arg2[%c0, %c0_1] : memref<32x128xbf16, #tpu.memory_space<vmem>>, vector<32x128xbf16>
    %c0_2 = arith.constant 0 : index
    %c0_3 = arith.constant 0 : index
    %4 = vector.load %arg3[%c0_2, %c0_3] : memref<128x256xbf16, #tpu.memory_space<vmem>>, vector<128x256xbf16>
    %cst = arith.constant dense<0.000000e+00> : vector<32x256xf32>
    %5 = tpu.matmul %3, %4, %cst {dimension_numbers = #tpu.dot_dimension_numbers<[1], [0], [0], [1], [0, 0, 1, 1], [], []>} : vector<32x128xbf16>, vector<128x256xbf16>, vector<32x256xf32> -> vector<32x256xf32>
    %c0_4 = arith.constant 0 : index
    %c0_5 = arith.constant 0 : index
    %6 = vector.load %arg4[%c0_4, %c0_5] : memref<32x1xi32, #tpu.memory_space<vmem>>, vector<32x1xi32>
    %7 = tpu.iota {dimensions = array<i32: 1>} : vector<32x256xi32>
    %c256_i32 = arith.constant 256 : i32
    %8 = arith.muli %arg1, %c256_i32 : i32
    %9 = vector.broadcast %8 : i32 to vector<32x256xi32>
    %10 = arith.addi %7, %9 : vector<32x256xi32>
    %11 = vector.broadcast %6 : vector<32x1xi32> to vector<32x256xi32>
    %12 = arith.cmpi eq, %10, %11 : vector<32x256xi32>
    %13 = arith.extui %12 : vector<32x256xi1> to vector<32x256xi32>
    %14 = arith.sitofp %13 : vector<32x256xi32> to vector<32x256xf32>
    %c0_6 = arith.constant 0 : index
    %c0_7 = arith.constant 0 : index
    %15 = vector.load %arg8[%c0_6, %c0_7] : memref<32x1xf32, #tpu.memory_space<vmem>>, vector<32x1xf32>
    %16 = arith.mulf %5, %14 : vector<32x256xf32>
    %cst_8 = arith.constant dense<0.000000e+00> : vector<32xf32>
    %17 = vector.multi_reduction <add>, %16, %cst_8 [1] : vector<32x256xf32> to vector<32xf32>
    %18 = vector.shape_cast %17 : vector<32xf32> to vector<32x1xf32>
    %19 = arith.addf %15, %18 : vector<32x1xf32>
    %c0_9 = arith.constant 0 : index
    %c0_10 = arith.constant 0 : index
    %20 = vector.load %arg8[%c0_9, %c0_10] : memref<32x1xf32, #tpu.memory_space<vmem>>, vector<32x1xf32>
    tpu.vector_store %arg8[%c0_9, %c0_10], %19 {strides = array<i32>} : memref<32x1xf32, #tpu.memory_space<vmem>>, vector<32x1xf32>,
    %c0_11 = arith.constant 0 : index
    %c0_12 = arith.constant 0 : index
    %21 = vector.load %arg6[%c0_11, %c0_12] : memref<32x1xf32, #tpu.memory_space<vmem>>, vector<32x1xf32>
    %cst_13 = arith.constant dense<0xFF800000> : vector<32xf32>
    %22 = vector.multi_reduction <maximumf>, %5, %cst_13 [1] : vector<32x256xf32> to vector<32xf32>
    %23 = vector.shape_cast %22 : vector<32xf32> to vector<32x1xf32>
    %24 = arith.maximumf %21, %23 : vector<32x1xf32>
    %c0_14 = arith.constant 0 : index
    %c0_15 = arith.constant 0 : index
    %25 = vector.load %arg7[%c0_14, %c0_15] : memref<32x1xf32, #tpu.memory_space<vmem>>, vector<32x1xf32>
    %26 = arith.subf %21, %24 : vector<32x1xf32>
    %27 = math.exp %26 : vector<32x1xf32>
    %28 = arith.mulf %25, %27 : vector<32x1xf32>
    %29 = vector.broadcast %24 : vector<32x1xf32> to vector<32x256xf32>
    %30 = arith.subf %5, %29 : vector<32x256xf32>
    %31 = math.exp %30 : vector<32x256xf32>
    %cst_16 = arith.constant dense<0.000000e+00> : vector<32xf32>
    %32 = vector.multi_reduction <add>, %31, %cst_16 [1] : vector<32x256xf32> to vector<32xf32>
    %33 = vector.shape_cast %32 : vector<32xf32> to vector<32x1xf32>
    %34 = arith.addf %28, %33 : vector<32x1xf32>
    %c0_17 = arith.constant 0 : index
    %c0_18 = arith.constant 0 : index
    %35 = vector.load %arg7[%c0_17, %c0_18] : memref<32x1xf32, #tpu.memory_space<vmem>>, vector<32x1xf32>
    tpu.vector_store %arg7[%c0_17, %c0_18], %34 {strides = array<i32>} : memref<32x1xf32, #tpu.memory_space<vmem>>, vector<32x1xf32>,
    %c0_19 = arith.constant 0 : index
    %c0_20 = arith.constant 0 : index
    %36 = vector.load %arg6[%c0_19, %c0_20] : memref<32x1xf32, #tpu.memory_space<vmem>>, vector<32x1xf32>
    tpu.vector_store %arg6[%c0_19, %c0_20], %24 {strides = array<i32>} : memref<32x1xf32, #tpu.memory_space<vmem>>, vector<32x1xf32>,
    %c0_i32_21 = arith.constant 0 : i32
    %37 = arith.cmpi eq, %arg1, %c0_i32_21 : i32
    %38 = arith.extui %37 : i1 to i32
    %c0_i32_22 = arith.constant 0 : i32
    %39 = arith.cmpi ne, %38, %c0_i32_22 : i32
    scf.if %39 {
      %c0_23 = arith.constant 0 : index
      %c0_24 = arith.constant 0 : index
      %40 = vector.load %arg6[%c0_23, %c0_24] : memref<32x1xf32, #tpu.memory_space<vmem>>, vector<32x1xf32>
      %c0_25 = arith.constant 0 : index
      %c0_26 = arith.constant 0 : index
      %41 = vector.load %arg7[%c0_25, %c0_26] : memref<32x1xf32, #tpu.memory_space<vmem>>, vector<32x1xf32>
      %42 = math.log %41 : vector<32x1xf32>
      %43 = arith.addf %40, %42 : vector<32x1xf32>
      %c0_i32_27 = arith.constant 0 : i32
      %44 = vector.broadcast %c0_i32_27 : i32 to vector<32x1xi32>
      %45 = arith.cmpi ne, %6, %44 : vector<32x1xi32>
      %46 = arith.extui %45 : vector<32x1xi1> to vector<32x1xi32>
      %47 = arith.sitofp %46 : vector<32x1xi32> to vector<32x1xf32>
      %c0_28 = arith.constant 0 : index
      %c0_29 = arith.constant 0 : index
      %48 = vector.load %arg8[%c0_28, %c0_29] : memref<32x1xf32, #tpu.memory_space<vmem>>, vector<32x1xf32>
      %49 = arith.subf %43, %48 : vector<32x1xf32>
      %50 = arith.mulf %49, %47 : vector<32x1xf32>
      %51 = vector.shape_cast %50 : vector<32x1xf32> to vector<1x32x1xf32>
      %cst_30 = arith.constant dense<0.000000e+00> : vector<1xf32>
      %52 = vector.multi_reduction <add>, %51, %cst_30 [1, 2] : vector<1x32x1xf32> to vector<1xf32>
      %53 = vector.shape_cast %52 : vector<1xf32> to vector<1x1x1xf32>
      %54 = vector.extract %53[0, 0, 0] : f32 from vector<1x1x1xf32>
      %55 = vector.shape_cast %47 : vector<32x1xf32> to vector<1x32x1xf32>
      %cst_31 = arith.constant dense<0.000000e+00> : vector<1xf32>
      %56 = vector.multi_reduction <add>, %55, %cst_31 [1, 2] : vector<1x32x1xf32> to vector<1xf32>
      %57 = vector.shape_cast %56 : vector<1xf32> to vector<1x1x1xf32>
      %58 = vector.extract %57[0, 0, 0] : f32 from vector<1x1x1xf32>
      %59 = tpu.iota {dimensions = array<i32: 1>} : vector<1x8x128xi32>
      %60 = tpu.iota {dimensions = array<i32: 2>} : vector<1x8x128xi32>
      %c0_i32_32 = arith.constant 0 : i32
      %61 = vector.broadcast %c0_i32_32 : i32 to vector<1x8x128xi32>
      %62 = arith.cmpi eq, %59, %61 : vector<1x8x128xi32>
      %c0_i32_33 = arith.constant 0 : i32
      %63 = vector.broadcast %c0_i32_33 : i32 to vector<1x8x128xi32>
      %64 = arith.cmpi eq, %60, %63 : vector<1x8x128xi32>
      %65 = arith.andi %62, %64 : vector<1x8x128xi1>
      %c0_i32_34 = arith.constant 0 : i32
      %66 = vector.broadcast %c0_i32_34 : i32 to vector<1x8x128xi32>
      %67 = arith.cmpi eq, %59, %66 : vector<1x8x128xi32>
      %c1_i32 = arith.constant 1 : i32
      %68 = vector.broadcast %c1_i32 : i32 to vector<1x8x128xi32>
      %69 = arith.cmpi eq, %60, %68 : vector<1x8x128xi32>
      %70 = arith.andi %67, %69 : vector<1x8x128xi1>
      %cst_35 = arith.constant 0.000000e+00 : f32
      %71 = vector.broadcast %58 : f32 to vector<1x8x128xf32>
      %72 = vector.broadcast %cst_35 : f32 to vector<1x8x128xf32>
      %73 = arith.select %70, %71, %72 : vector<1x8x128xi1>, vector<1x8x128xf32>
      %74 = vector.broadcast %54 : f32 to vector<1x8x128xf32>
      %75 = arith.select %65, %74, %73 : vector<1x8x128xi1>, vector<1x8x128xf32>
      %c0_36 = arith.constant 0 : index
      %c0_37 = arith.constant 0 : index
      %c0_38 = arith.constant 0 : index
      %76 = vector.load %arg5[%c0_36, %c0_37, %c0_38] : memref<1x8x128xf32, #tpu.memory_space<vmem>>, vector<1x8x128xf32>
      tpu.vector_store %arg5[%c0_36, %c0_37, %c0_38], %75 {strides = array<i32>} : memref<1x8x128xf32, #tpu.memory_space<vmem>>, vector<1x8x128xf32>,
    } else {
    }
    return
  }
  func.func @transform_0(%arg0: i32, %arg1: i32) -> (i32, i32) {
    %c0_i32 = arith.constant 0 : i32
    %c0_i32_0 = arith.constant 0 : i32
    return %arg0, %c0_i32 : i32, i32
  }
  func.func @transform_1(%arg0: i32, %arg1: i32) -> (i32, i32) {
    %c0_i32 = arith.constant 0 : i32
    %c0_i32_0 = arith.constant 0 : i32
    return %c0_i32, %arg1 : i32, i32
  }
  func.func @transform_2(%arg0: i32, %arg1: i32) -> (i32, i32) {
    %c0_i32 = arith.constant 0 : i32
    %c0_i32_0 = arith.constant 0 : i32
    return %arg0, %c0_i32 : i32, i32
  }
  func.func @transform_3(%arg0: i32, %arg1: i32) -> (i32, i32, i32) {
    %c0_i32 = arith.constant 0 : i32
    %c0_i32_0 = arith.constant 0 : i32
    %c0_i32_1 = arith.constant 0 : i32
    return %arg0, %c0_i32, %c0_i32_0 : i32, i32, i32
  }
}

module attributes {stable_mosaic.version = 11 : i64} {
  func.func @_cosine_kernel(%arg0: i32, %arg1: memref<1x1x128xf32, #tpu.memory_space<vmem>>, %arg2: memref<1x128x128xf32, #tpu.memory_space<vmem>>, %arg3: memref<1x1x128xf32, #tpu.memory_space<vmem>>) attributes {dimension_semantics = [#tpu.dimension_semantics<parallel>], iteration_bounds = array<i64: 2>, scalar_prefetch = 0 : i64, scratch_operands = 0 : i64, tpu.core_type = #tpu.core_type<tc>, window_params = [{transform_indices = @transform_0, window_bounds = array<i64: 1, 1, 128>}, {transform_indices = @transform_1, window_bounds = array<i64: 1, 128, 128>}, {transform_indices = @transform_2, window_bounds = array<i64: 1, 1, 128>}]} {
    %c0 = arith.constant 0 : index
    %c0_0 = arith.constant 0 : index
    %c0_1 = arith.constant 0 : index
    %0 = vector.load %arg1[%c0, %c0_0, %c0_1] : memref<1x1x128xf32, #tpu.memory_space<vmem>>, vector<1x1x128xf32>
    %1 = vector.shape_cast %0 : vector<1x1x128xf32> to vector<1x128xf32>
    %c0_2 = arith.constant 0 : index
    %c0_3 = arith.constant 0 : index
    %c0_4 = arith.constant 0 : index
    %2 = vector.load %arg2[%c0_2, %c0_3, %c0_4] : memref<1x128x128xf32, #tpu.memory_space<vmem>>, vector<1x128x128xf32>
    %3 = vector.shape_cast %2 : vector<1x128x128xf32> to vector<128x128xf32>
    %cst = arith.constant dense<0.000000e+00> : vector<1x128xf32>
    %4 = tpu.matmul %1, %3, %cst {dimension_numbers = #tpu.dot_dimension_numbers<[1], [0], [0], [1], [0, 0, 1, 1], [], []>} : vector<1x128xf32>, vector<128x128xf32>, vector<1x128xf32> -> vector<1x128xf32>
    %5 = arith.mulf %1, %1 : vector<1x128xf32>
    %6 = vector.shape_cast %5 : vector<1x128xf32> to vector<1x1x128xf32>
    %cst_5 = arith.constant dense<0.000000e+00> : vector<1xf32>
    %7 = vector.multi_reduction <add>, %6, %cst_5 [1, 2] : vector<1x1x128xf32> to vector<1xf32>
    %8 = vector.shape_cast %7 : vector<1xf32> to vector<1x1x1xf32>
    %9 = vector.extract %8[0, 0, 0] : f32 from vector<1x1x1xf32>
    %10 = arith.mulf %3, %3 : vector<128x128xf32>
    %cst_6 = arith.constant dense<0.000000e+00> : vector<128xf32>
    %11 = vector.multi_reduction <add>, %10, %cst_6 [0] : vector<128x128xf32> to vector<128xf32>
    %12 = vector.shape_cast %11 : vector<128xf32> to vector<1x128xf32>
    %13 = math.sqrt %9 : f32
    %14 = math.sqrt %12 : vector<1x128xf32>
    %15 = vector.broadcast %13 : f32 to vector<1x128xf32>
    %16 = arith.mulf %15, %14 : vector<1x128xf32>
    %cst_7 = arith.constant 9.99999993E-9 : f32
    %17 = vector.broadcast %cst_7 : f32 to vector<1x128xf32>
    %18 = arith.maximumf %16, %17 : vector<1x128xf32>
    %19 = tpu.reciprocal %18 {approx = true} : vector<1x128xf32> -> vector<1x128xf32>
    %20 = arith.mulf %4, %19 : vector<1x128xf32>
    %c0_8 = arith.constant 0 : index
    %c0_9 = arith.constant 0 : index
    %c0_10 = arith.constant 0 : index
    %21 = vector.load %arg3[%c0_8, %c0_9, %c0_10] : memref<1x1x128xf32, #tpu.memory_space<vmem>>, vector<1x1x128xf32>
    %22 = vector.shape_cast %21 : vector<1x1x128xf32> to vector<1x128xf32>
    %23 = vector.shape_cast %20 : vector<1x128xf32> to vector<1x1x128xf32>
    tpu.vector_store %arg3[%c0_8, %c0_9, %c0_10], %23 {strides = array<i32>} : memref<1x1x128xf32, #tpu.memory_space<vmem>>, vector<1x1x128xf32>,
    return
  }
  func.func @transform_0(%arg0: i32) -> (i32, i32, i32) {
    %c0_i32 = arith.constant 0 : i32
    %c0_i32_0 = arith.constant 0 : i32
    %c0_i32_1 = arith.constant 0 : i32
    return %arg0, %c0_i32, %c0_i32_0 : i32, i32, i32
  }
  func.func @transform_1(%arg0: i32) -> (i32, i32, i32) {
    %c0_i32 = arith.constant 0 : i32
    %c0_i32_0 = arith.constant 0 : i32
    %c0_i32_1 = arith.constant 0 : i32
    return %arg0, %c0_i32, %c0_i32_0 : i32, i32, i32
  }
  func.func @transform_2(%arg0: i32) -> (i32, i32, i32) {
    %c0_i32 = arith.constant 0 : i32
    %c0_i32_0 = arith.constant 0 : i32
    %c0_i32_1 = arith.constant 0 : i32
    return %arg0, %c0_i32, %c0_i32_0 : i32, i32, i32
  }
}

</mosaic_0001>

<llo_original>
// kernel: _lambda_.7
$region0: #{_lambda_.7}
  #allocation0 [shape = 'u32[]', space=smem, size = 0x4, offset = 0x4, fixed_abs, tag = 'smem constant byte address 0x4 - core index']
  #allocation1 [shape = 'u32[144,128]{1,0:T(1,128)}', space=vmem, size = 0x12000, scoped, tag = 'internal scratch']
  %s0 = inlined_call_operand.vmem [shape: bf16[32,128], index: 0, kind: input, shape index: {}]
  %s1 = inlined_call_operand.vmem [shape: bf16[128,128], index: 1, kind: input, shape index: {}]
  %s2 = inlined_call_operand.vmem [shape: f32[1,128], index: 2, kind: input, shape index: {}]
  %s3 = inlined_call_operand.vmem [shape: f32[32,128], index: 3, kind: output, shape index: {}]
  %s4 = sld [smem:[#allocation0]]
  $region22: #{_lambda_.7} parent=0
    _
  %s6 = ssub.s32 1, %s4
  %s7 = scalar_select 0, %s6, %s4
  // Predicated region
  $region2: #{_lambda_.7} parent=0 // pred_check
    _
  $region3: #{_lambda_.7} parent=0 // pred_check_branch
    %9 = sbr.rel (0) target = $region5
  $region4: #{_lambda_.7} parent=0 // pred_region
    _
  $region5: #{_lambda_.7} parent=0 // pred_fallthru
    _
  // Predicated region
  $region6: #{_lambda_.7} parent=0 // pred_check
    _
  $region7: #{_lambda_.7} parent=0 // pred_check_branch
    %11 = sbr.rel (0) target = $region9
  $region8: #{_lambda_.7} parent=0 // pred_region
    _
  $region9: #{_lambda_.7} parent=0 // pred_fallthru
    _
  // Predicated region
  $region10: #{_lambda_.7} parent=0 // pred_check
    _
  $region11: #{_lambda_.7} parent=0 // pred_check_branch
    %13 = sbr.rel (0) target = $region13
  $region12: #{_lambda_.7} parent=0 // pred_region
    _
  $region13: #{_lambda_.7} parent=0 // pred_fallthru
    _
  %v15 = vld [vmem:[%s0] sm:$0xf]
  %v16 = vld [vmem:[%s0 + $0x4] sm:$0xf]
  %v17 = vld [vmem:[%s0 + $0x8] sm:$0xf]
  %v18 = vld [vmem:[%s0 + $0xc] sm:$0xf]
  %v19 = vld [vmem:[%s1] sm:$0xf]
  %v20 = vld [vmem:[%s1 + $0x4] sm:$0xf]
  %v21 = vld [vmem:[%s1 + $0x8] sm:$0xf]
  %v22 = vld [vmem:[%s1 + $0xc] sm:$0xf]
  %v23 = vld [vmem:[%s1 + $0x10] sm:$0xf]
  %v24 = vld [vmem:[%s1 + $0x14] sm:$0xf]
  %v25 = vld [vmem:[%s1 + $0x18] sm:$0xf]
  %v26 = vld [vmem:[%s1 + $0x1c] sm:$0xf]
  %v27 = vld [vmem:[%s1 + $0x20] sm:$0xf]
  %v28 = vld [vmem:[%s1 + $0x24] sm:$0xf]
  %v29 = vld [vmem:[%s1 + $0x28] sm:$0xf]
  %v30 = vld [vmem:[%s1 + $0x2c] sm:$0xf]
  %v31 = vld [vmem:[%s1 + $0x30] sm:$0xf]
  %v32 = vld [vmem:[%s1 + $0x34] sm:$0xf]
  %v33 = vld [vmem:[%s1 + $0x38] sm:$0xf]
  %v34 = vld [vmem:[%s1 + $0x3c] sm:$0xf]
  %v35 = vld [vmem:[%s2] sm:$0x1]
  %v37 = vlaneseq
  %v38 = vshrl.u32 %v37, 7
  %v39 = vsub.s32 0, %v38
  %v40 = vrot.slane %v35, %v39
  %v46 = vunpack.c.l.b16 %v15
  %v47 = vunpack.c.l.b16 %v16
  %v48 = vunpack.c.l.b16 %v17
  %v49 = vunpack.c.l.b16 %v18
  %v50 = vpack.c.b16 %v47, %v46
  %v51 = vpack.c.b16 %v49, %v48
  %v70 = vunpack.c.l.b16 %v19
  %v71 = vunpack.c.l.b16 %v20
  %v72 = vunpack.c.l.b16 %v21
  %v73 = vunpack.c.l.b16 %v22
  %v74 = vunpack.c.l.b16 %v23
  %v75 = vunpack.c.l.b16 %v24
  %v76 = vunpack.c.l.b16 %v25
  %v77 = vunpack.c.l.b16 %v26
  %v78 = vunpack.c.l.b16 %v27
  %v79 = vunpack.c.l.b16 %v28
  %v80 = vunpack.c.l.b16 %v29
  %v81 = vunpack.c.l.b16 %v30
  %v82 = vunpack.c.l.b16 %v31
  %v83 = vunpack.c.l.b16 %v32
  %v84 = vunpack.c.l.b16 %v33
  %v85 = vunpack.c.l.b16 %v34
  %v86 = vpack.c.b16 %v71, %v70
  %v87 = vpack.c.b16 %v73, %v72
  %v88 = vpack.c.b16 %v75, %v74
  %v89 = vpack.c.b16 %v77, %v76
  %v90 = vpack.c.b16 %v79, %v78
  %v91 = vpack.c.b16 %v81, %v80
  %v92 = vpack.c.b16 %v83, %v82
  %v93 = vpack.c.b16 %v85, %v84
  %102 = vmatprep.subr.bf16.mxu0 0
  %103 = vmatpush1.bf16.msra.mxu0 %v86
  %104 = vmatprep.subr.bf16.mxu0 0
  %105 = vmatpush1.bf16.msra.mxu0 %v87
  %106 = vmatprep.subr.bf16.mxu0 0
  %107 = vmatpush1.bf16.msra.mxu0 %v88
  %108 = vmatprep.subr.bf16.mxu0 0
  %109 = vmatpush1.bf16.msra.mxu0 %v89
  %110 = vmatprep.subr.bf16.mxu0 0
  %111 = vmatpush1.bf16.msra.mxu0 %v90
  %112 = vmatprep.subr.bf16.mxu0 0
  %113 = vmatpush1.bf16.msra.mxu0 %v91
  %114 = vmatprep.subr.bf16.mxu0 0
  %115 = vmatpush1.bf16.msra.mxu0 %v92
  %116 = vmatprep.subr.bf16.mxu0 0
  %117 = vmatpush1.bf16.msra.mxu0 %v93
  %118 = vmatprep.subr.bf16.mxu0 0
  %119 = vmatpush1.bf16.msra.mxu0 0
  %120 = vmatprep.subr.bf16.mxu0 0
  %121 = vmatpush1.bf16.msra.mxu0 0
  %122 = vmatprep.subr.bf16.mxu0 0
  %123 = vmatpush1.bf16.msra.mxu0 0
  %124 = vmatprep.subr.bf16.mxu0 0
  %125 = vmatpush1.bf16.msra.mxu0 0
  %126 = vmatprep.subr.bf16.mxu0 0
  %127 = vmatpush1.bf16.msra.mxu0 0
  %128 = vmatprep.subr.bf16.mxu0 0
  %129 = vmatpush1.bf16.msra.mxu0 0
  %130 = vmatprep.subr.bf16.mxu0 0
  %131 = vmatpush1.bf16.msra.mxu0 0
  %132 = vmatprep.subr.bf16.mxu0 0
  %133 = vmatpush1.bf16.msra.mxu0 0
  %134 = vmatprep.mubr.bf16.mxu0 0
  %135 = vmatmul.mubr.bf16.gmra.mrb[0].mxu0 %v50
  %v136 = vpop.f32.mrb[0].mxu0
  %v137 = vadd.f32 %v40, %v136
  %v138 = vpop.f32.mrb[0].mxu0
  %v139 = vpop.f32.mrb[0].mxu0
  %v140 = vadd.f32 %v40, %v139
  %v141 = vpop.f32.mrb[0].mxu0
  %142 = vmatprep.mubr.bf16.mxu0 0
  %143 = vmatmul.mubr.bf16.gmra.mrb[0].mxu0 %v51
  %v144 = vpop.f32.mrb[0].mxu0
  %v145 = vadd.f32 %v40, %v144
  %v146 = vpop.f32.mrb[0].mxu0
  %v147 = vpop.f32.mrb[0].mxu0
  %v148 = vadd.f32 %v40, %v147
  %v149 = vpop.f32.mrb[0].mxu0
  %150 = vdwg.mxu0
  %v151 = vmax.f32 %v137, 0.0
  %v152 = vmax.f32 %v140, 0.0
  %v153 = vmax.f32 %v145, 0.0
  %v154 = vmax.f32 %v148, 0.0
  %155 = vst [vmem:[%s3] sm:$0xff] %v151
  %156 = vst [vmem:[%s3 + $0x8] sm:$0xff] %v152
  %157 = vst [vmem:[%s3 + $0x10] sm:$0xff] %v153
  %158 = vst [vmem:[%s3 + $0x18] sm:$0xff] %v154
  // Predicated region
  $region14: #{_lambda_.7} parent=0 // pred_check
    _
  $region15: #{_lambda_.7} parent=0 // pred_check_branch
    %160 = sbr.rel (0) target = $region17
  $region16: #{_lambda_.7} parent=0 // pred_region
    _
  $region17: #{_lambda_.7} parent=0 // pred_fallthru
    _
  // Predicated region
  $region18: #{_lambda_.7} parent=0 // pred_check
    _
  $region19: #{_lambda_.7} parent=0 // pred_check_branch
    %162 = sbr.rel (0) target = $region21
  $region20: #{_lambda_.7} parent=0 // pred_region
    _
  $region21: #{_lambda_.7} parent=0 // pred_fallthru
    _

// kernel: _lambda_.12
$region0: #{_lambda_.12}
  #allocation0 [shape = 'u32[]', space=smem, size = 0x4, offset = 0x4, fixed_abs, tag = 'smem constant byte address 0x4 - core index']
  #allocation1 [shape = 'u32[144,128]{1,0:T(1,128)}', space=vmem, size = 0x12000, scoped, tag = 'internal scratch']
  %s0 = inlined_call_operand.vmem [shape: bf16[32,128], index: 0, kind: input, shape index: {}]
  %s1 = inlined_call_operand.vmem [shape: bf16[128,128], index: 1, kind: input, shape index: {}]
  %s2 = inlined_call_operand.vmem [shape: f32[1,128], index: 2, kind: input, shape index: {}]
  %s3 = inlined_call_operand.vmem [shape: f32[2,32], index: 3, kind: input, shape index: {}]
  %s4 = inlined_call_operand.vmem [shape: f32[2,128], index: 4, kind: output, shape index: {}]
  %s5 = sld [smem:[#allocation0]]
  $region26: #{_lambda_.12} parent=0
    _
  %s7 = ssub.s32 1, %s5
  %s8 = scalar_select 0, %s7, %s5
  // Predicated region
  $region2: #{_lambda_.12} parent=0 // pred_check
    _
  $region3: #{_lambda_.12} parent=0 // pred_check_branch
    %10 = sbr.rel (0) target = $region5
  $region4: #{_lambda_.12} parent=0 // pred_region
    _
  $region5: #{_lambda_.12} parent=0 // pred_fallthru
    _
  // Predicated region
  $region6: #{_lambda_.12} parent=0 // pred_check
    _
  $region7: #{_lambda_.12} parent=0 // pred_check_branch
    %12 = sbr.rel (0) target = $region9
  $region8: #{_lambda_.12} parent=0 // pred_region
    _
  $region9: #{_lambda_.12} parent=0 // pred_fallthru
    _
  // Predicated region
  $region10: #{_lambda_.12} parent=0 // pred_check
    _
  $region11: #{_lambda_.12} parent=0 // pred_check_branch
    %14 = sbr.rel (0) target = $region13
  $region12: #{_lambda_.12} parent=0 // pred_region
    _
  $region13: #{_lambda_.12} parent=0 // pred_fallthru
    _
  // Predicated region
  $region14: #{_lambda_.12} parent=0 // pred_check
    _
  $region15: #{_lambda_.12} parent=0 // pred_check_branch
    %16 = sbr.rel (0) target = $region17
  $region16: #{_lambda_.12} parent=0 // pred_region
    _
  $region17: #{_lambda_.12} parent=0 // pred_fallthru
    _
  %v18 = vld [vmem:[%s0] sm:$0xf]
  %v19 = vld [vmem:[%s0 + $0x4] sm:$0xf]
  %v20 = vld [vmem:[%s0 + $0x8] sm:$0xf]
  %v21 = vld [vmem:[%s0 + $0xc] sm:$0xf]
  %v22 = vld [vmem:[%s1] sm:$0xf]
  %v23 = vld [vmem:[%s1 + $0x4] sm:$0xf]
  %v24 = vld [vmem:[%s1 + $0x8] sm:$0xf]
  %v25 = vld [vmem:[%s1 + $0xc] sm:$0xf]
  %v26 = vld [vmem:[%s1 + $0x10] sm:$0xf]
  %v27 = vld [vmem:[%s1 + $0x14] sm:$0xf]
  %v28 = vld [vmem:[%s1 + $0x18] sm:$0xf]
  %v29 = vld [vmem:[%s1 + $0x1c] sm:$0xf]
  %v30 = vld [vmem:[%s1 + $0x20] sm:$0xf]
  %v31 = vld [vmem:[%s1 + $0x24] sm:$0xf]
  %v32 = vld [vmem:[%s1 + $0x28] sm:$0xf]
  %v33 = vld [vmem:[%s1 + $0x2c] sm:$0xf]
  %v34 = vld [vmem:[%s1 + $0x30] sm:$0xf]
  %v35 = vld [vmem:[%s1 + $0x34] sm:$0xf]
  %v36 = vld [vmem:[%s1 + $0x38] sm:$0xf]
  %v37 = vld [vmem:[%s1 + $0x3c] sm:$0xf]
  %v38 = vld [vmem:[%s2] sm:$0x1]
  %v40 = vlaneseq
  %v41 = vshrl.u32 %v40, 7
  %v42 = vsub.s32 0, %v41
  %v43 = vrot.slane %v38, %v42
  %v49 = vunpack.c.l.b16 %v18
  %v50 = vunpack.c.l.b16 %v19
  %v51 = vunpack.c.l.b16 %v20
  %v52 = vunpack.c.l.b16 %v21
  %v53 = vpack.c.b16 %v50, %v49
  %v54 = vpack.c.b16 %v52, %v51
  %v73 = vunpack.c.l.b16 %v22
  %v74 = vunpack.c.l.b16 %v23
  %v75 = vunpack.c.l.b16 %v24
  %v76 = vunpack.c.l.b16 %v25
  %v77 = vunpack.c.l.b16 %v26
  %v78 = vunpack.c.l.b16 %v27
  %v79 = vunpack.c.l.b16 %v28
  %v80 = vunpack.c.l.b16 %v29
  %v81 = vunpack.c.l.b16 %v30
  %v82 = vunpack.c.l.b16 %v31
  %v83 = vunpack.c.l.b16 %v32
  %v84 = vunpack.c.l.b16 %v33
  %v85 = vunpack.c.l.b16 %v34
  %v86 = vunpack.c.l.b16 %v35
  %v87 = vunpack.c.l.b16 %v36
  %v88 = vunpack.c.l.b16 %v37
  %v89 = vpack.c.b16 %v74, %v73
  %v90 = vpack.c.b16 %v76, %v75
  %v91 = vpack.c.b16 %v78, %v77
  %v92 = vpack.c.b16 %v80, %v79
  %v93 = vpack.c.b16 %v82, %v81
  %v94 = vpack.c.b16 %v84, %v83
  %v95 = vpack.c.b16 %v86, %v85
  %v96 = vpack.c.b16 %v88, %v87
  %105 = vmatprep.subr.bf16.mxu0 0
  %106 = vmatpush1.bf16.msra.mxu0 %v89
  %107 = vmatprep.subr.bf16.mxu0 0
  %108 = vmatpush1.bf16.msra.mxu0 %v90
  %109 = vmatprep.subr.bf16.mxu0 0
  %110 = vmatpush1.bf16.msra.mxu0 %v91
  %111 = vmatprep.subr.bf16.mxu0 0
  %112 = vmatpush1.bf16.msra.mxu0 %v92
  %113 = vmatprep.subr.bf16.mxu0 0
  %114 = vmatpush1.bf16.msra.mxu0 %v93
  %115 = vmatprep.subr.bf16.mxu0 0
  %116 = vmatpush1.bf16.msra.mxu0 %v94
  %117 = vmatprep.subr.bf16.mxu0 0
  %118 = vmatpush1.bf16.msra.mxu0 %v95
  %119 = vmatprep.subr.bf16.mxu0 0
  %120 = vmatpush1.bf16.msra.mxu0 %v96
  %121 = vmatprep.subr.bf16.mxu0 0
  %122 = vmatpush1.bf16.msra.mxu0 0
  %123 = vmatprep.subr.bf16.mxu0 0
  %124 = vmatpush1.bf16.msra.mxu0 0
  %125 = vmatprep.subr.bf16.mxu0 0
  %126 = vmatpush1.bf16.msra.mxu0 0
  %127 = vmatprep.subr.bf16.mxu0 0
  %128 = vmatpush1.bf16.msra.mxu0 0
  %129 = vmatprep.subr.bf16.mxu0 0
  %130 = vmatpush1.bf16.msra.mxu0 0
  %131 = vmatprep.subr.bf16.mxu0 0
  %132 = vmatpush1.bf16.msra.mxu0 0
  %133 = vmatprep.subr.bf16.mxu0 0
  %134 = vmatpush1.bf16.msra.mxu0 0
  %135 = vmatprep.subr.bf16.mxu0 0
  %136 = vmatpush1.bf16.msra.mxu0 0
  %137 = vmatprep.mubr.bf16.mxu0 0
  %138 = vmatmul.mubr.bf16.gmra.mrb[0].mxu0 %v53
  %v139 = vpop.f32.mrb[0].mxu0
  %v140 = vadd.f32 %v43, %v139
  %v141 = vpop.f32.mrb[0].mxu0
  %v142 = vpop.f32.mrb[0].mxu0
  %v143 = vadd.f32 %v43, %v142
  %v144 = vpop.f32.mrb[0].mxu0
  %145 = vmatprep.mubr.bf16.mxu0 0
  %146 = vmatmul.mubr.bf16.gmra.mrb[0].mxu0 %v54
  %v147 = vpop.f32.mrb[0].mxu0
  %v148 = vadd.f32 %v43, %v147
  %v149 = vpop.f32.mrb[0].mxu0
  %v150 = vpop.f32.mrb[0].mxu0
  %v151 = vadd.f32 %v43, %v150
  %v152 = vpop.f32.mrb[0].mxu0
  %153 = vdwg.mxu0
  %v154 = vmax.f32 %v140, 0.0
  %v155 = vmax.f32 %v143, 0.0
  %v156 = vmax.f32 %v148, 0.0
  %v157 = vmax.f32 %v151, 0.0
  %v158 = vld [vmem:[%s3] sm:$0x3]
  %vm159 = vcmask 261120
  %v161 = vsel %vm159, %v158, 0
  %163 = vmatprep.subr.mxu0 0.0
  %164 = vmatpush1.msra.mxu0 %v154
  %165 = vmatprep.subr.mxu0 0.0
  %166 = vmatpush1.msra.mxu0 %v155
  %167 = vmatprep.subr.mxu0 0.0
  %168 = vmatpush1.msra.mxu0 %v156
  %169 = vmatprep.subr.mxu0 0.0
  %170 = vmatpush1.msra.mxu0 %v157
  %171 = vmatprep.subr.mxu0 0.0
  %172 = vmatpush1.msra.mxu0 0.0
  %173 = vmatprep.subr.mxu0 0.0
  %174 = vmatpush1.msra.mxu0 0.0
  %175 = vmatprep.subr.mxu0 0.0
  %176 = vmatpush1.msra.mxu0 0.0
  %177 = vmatprep.subr.mxu0 0.0
  %178 = vmatpush1.msra.mxu0 0.0
  %179 = vmatprep.subr.mxu0 0.0
  %180 = vmatpush1.msra.mxu0 0.0
  %181 = vmatprep.subr.mxu0 0.0
  %182 = vmatpush1.msra.mxu0 0.0
  %183 = vmatprep.subr.mxu0 0.0
  %184 = vmatpush1.msra.mxu0 0.0
  %185 = vmatprep.subr.mxu0 0.0
  %186 = vmatpush1.msra.mxu0 0.0
  %187 = vmatprep.subr.mxu0 0.0
  %188 = vmatpush1.msra.mxu0 0.0
  %189 = vmatprep.subr.mxu0 0.0
  %190 = vmatpush1.msra.mxu0 0.0
  %191 = vmatprep.subr.mxu0 0.0
  %192 = vmatpush1.msra.mxu0 0.0
  %193 = vmatprep.subr.mxu0 0.0
  %194 = vmatpush1.msra.mxu0 0.0
  %195 = vmatprep.subr.mxu0 0.0
  %196 = vmatpush1.msra.mxu0 0.0
  %197 = vmatprep.subr.mxu0 0.0
  %198 = vmatpush1.msra.mxu0 0.0
  %199 = vmatprep.subr.mxu0 0.0
  %200 = vmatpush1.msra.mxu0 0.0
  %201 = vmatprep.subr.mxu0 0.0
  %202 = vmatpush1.msra.mxu0 0.0
  %203 = vmatprep.subr.mxu0 0.0
  %204 = vmatpush1.msra.mxu0 0.0
  %205 = vmatprep.subr.mxu0 0.0
  %206 = vmatpush1.msra.mxu0 0.0
  %207 = vmatprep.subr.mxu0 0.0
  %208 = vmatpush1.msra.mxu0 0.0
  %209 = vmatprep.subr.mxu0 0.0
  %210 = vmatpush1.msra.mxu0 0.0
  %211 = vmatprep.subr.mxu0 0.0
  %212 = vmatpush1.msra.mxu0 0.0
  %213 = vmatprep.subr.mxu0 0.0
  %214 = vmatpush1.msra.mxu0 0.0
  %215 = vmatprep.subr.mxu0 0.0
  %216 = vmatpush1.msra.mxu0 0.0
  %217 = vmatprep.subr.mxu0 0.0
  %218 = vmatpush1.msra.mxu0 0.0
  %219 = vmatprep.subr.mxu0 0.0
  %220 = vmatpush1.msra.mxu0 0.0
  %221 = vmatprep.subr.mxu0 0.0
  %222 = vmatpush1.msra.mxu0 0.0
  %223 = vmatprep.subr.mxu0 0.0
  %224 = vmatpush1.msra.mxu0 0.0
  %225 = vmatprep.subr.mxu0 0.0
  %226 = vmatpush1.msra.mxu0 0.0
  %227 = vmatprep.mubr.f32.mxu0 0.0
  %228 = vmatmul.mubr.f32.gmra.mrb[0].mxu0 %v161
  %v229 = vpop.f32.mrb[0].mxu0
  %v230 = vadd.f32 0.0, %v229
  %v231 = vpop.f32.mrb[0].mxu0
  %232 = vdwg.mxu0
  %233 = vst [vmem:[%s4] sm:$0x3] %v230
  // Predicated region
  $region18: #{_lambda_.12} parent=0 // pred_check
    _
  $region19: #{_lambda_.12} parent=0 // pred_check_branch
    %235 = sbr.rel (0) target = $region21
  $region20: #{_lambda_.12} parent=0 // pred_region
    _
  $region21: #{_lambda_.12} parent=0 // pred_fallthru
    _
  // Predicated region
  $region22: #{_lambda_.12} parent=0 // pred_check
    _
  $region23: #{_lambda_.12} parent=0 // pred_check_branch
    %237 = sbr.rel (0) target = $region25
  $region24: #{_lambda_.12} parent=0 // pred_region
    _
  $region25: #{_lambda_.12} parent=0 // pred_fallthru
    _

// kernel: _lambda_.10
$region0: #{_lambda_.10}
  #allocation0 [shape = 'u32[]', space=smem, size = 0x4, offset = 0x4, fixed_abs, tag = 'smem constant byte address 0x4 - core index']
  #allocation1 [shape = 'u32[144,128]{1,0:T(1,128)}', space=vmem, size = 0x12000, scoped, tag = 'internal scratch']
  %s0 = inlined_call_operand.vmem [shape: bf16[96,128], index: 0, kind: input, shape index: {}]
  %s1 = inlined_call_operand.vmem [shape: bf16[128,128], index: 1, kind: input, shape index: {}]
  %s2 = inlined_call_operand.vmem [shape: f32[1,128], index: 2, kind: input, shape index: {}]
  %s3 = inlined_call_operand.vmem [shape: f32[96,128], index: 3, kind: output, shape index: {}]
  %s4 = sld [smem:[#allocation0]]
  $region22: #{_lambda_.10} parent=0
    _
  %s6 = ssub.s32 1, %s4
  %s7 = scalar_select 0, %s6, %s4
  // Predicated region
  $region2: #{_lambda_.10} parent=0 // pred_check
    _
  $region3: #{_lambda_.10} parent=0 // pred_check_branch
    %9 = sbr.rel (0) target = $region5
  $region4: #{_lambda_.10} parent=0 // pred_region
    _
  $region5: #{_lambda_.10} parent=0 // pred_fallthru
    _
  // Predicated region
  $region6: #{_lambda_.10} parent=0 // pred_check
    _
  $region7: #{_lambda_.10} parent=0 // pred_check_branch
    %11 = sbr.rel (0) target = $region9
  $region8: #{_lambda_.10} parent=0 // pred_region
    _
  $region9: #{_lambda_.10} parent=0 // pred_fallthru
    _
  // Predicated region
  $region10: #{_lambda_.10} parent=0 // pred_check
    _
  $region11: #{_lambda_.10} parent=0 // pred_check_branch
    %13 = sbr.rel (0) target = $region13
  $region12: #{_lambda_.10} parent=0 // pred_region
    _
  $region13: #{_lambda_.10} parent=0 // pred_fallthru
    _
  %v15 = vld [vmem:[%s0] sm:$0xf]
  %v16 = vld [vmem:[%s0 + $0x4] sm:$0xf]
  %v17 = vld [vmem:[%s0 + $0x8] sm:$0xf]
  %v18 = vld [vmem:[%s0 + $0xc] sm:$0xf]
  %v19 = vld [vmem:[%s0 + $0x10] sm:$0xf]
  %v20 = vld [vmem:[%s0 + $0x14] sm:$0xf]
  %v21 = vld [vmem:[%s0 + $0x18] sm:$0xf]
  %v22 = vld [vmem:[%s0 + $0x1c] sm:$0xf]
  %v23 = vld [vmem:[%s0 + $0x20] sm:$0xf]
  %v24 = vld [vmem:[%s0 + $0x24] sm:$0xf]
  %v25 = vld [vmem:[%s0 + $0x28] sm:$0xf]
  %v26 = vld [vmem:[%s0 + $0x2c] sm:$0xf]
  %v27 = vld [vmem:[%s1] sm:$0xf]
  %v28 = vld [vmem:[%s1 + $0x4] sm:$0xf]
  %v29 = vld [vmem:[%s1 + $0x8] sm:$0xf]
  %v30 = vld [vmem:[%s1 + $0xc] sm:$0xf]
  %v31 = vld [vmem:[%s1 + $0x10] sm:$0xf]
  %v32 = vld [vmem:[%s1 + $0x14] sm:$0xf]
  %v33 = vld [vmem:[%s1 + $0x18] sm:$0xf]
  %v34 = vld [vmem:[%s1 + $0x1c] sm:$0xf]
  %v35 = vld [vmem:[%s1 + $0x20] sm:$0xf]
  %v36 = vld [vmem:[%s1 + $0x24] sm:$0xf]
  %v37 = vld [vmem:[%s1 + $0x28] sm:$0xf]
  %v38 = vld [vmem:[%s1 + $0x2c] sm:$0xf]
  %v39 = vld [vmem:[%s1 + $0x30] sm:$0xf]
  %v40 = vld [vmem:[%s1 + $0x34] sm:$0xf]
  %v41 = vld [vmem:[%s1 + $0x38] sm:$0xf]
  %v42 = vld [vmem:[%s1 + $0x3c] sm:$0xf]
  %v43 = vld [vmem:[%s2] sm:$0x1]
  %v45 = vlaneseq
  %v46 = vshrl.u32 %v45, 7
  %v47 = vsub.s32 0, %v46
  %v48 = vrot.slane %v43, %v47
  %v62 = vunpack.c.l.b16 %v15
  %v63 = vunpack.c.l.b16 %v16
  %v64 = vunpack.c.l.b16 %v17
  %v65 = vunpack.c.l.b16 %v18
  %v66 = vunpack.c.l.b16 %v19
  %v67 = vunpack.c.l.b16 %v20
  %v68 = vunpack.c.l.b16 %v21
  %v69 = vunpack.c.l.b16 %v22
  %v70 = vunpack.c.l.b16 %v23
  %v71 = vunpack.c.l.b16 %v24
  %v72 = vunpack.c.l.b16 %v25
  %v73 = vunpack.c.l.b16 %v26
  %v74 = vpack.c.b16 %v63, %v62
  %v75 = vpack.c.b16 %v65, %v64
  %v76 = vpack.c.b16 %v67, %v66
  %v77 = vpack.c.b16 %v69, %v68
  %v78 = vpack.c.b16 %v71, %v70
  %v79 = vpack.c.b16 %v73, %v72
  %v102 = vunpack.c.l.b16 %v27
  %v103 = vunpack.c.l.b16 %v28
  %v104 = vunpack.c.l.b16 %v29
  %v105 = vunpack.c.l.b16 %v30
  %v106 = vunpack.c.l.b16 %v31
  %v107 = vunpack.c.l.b16 %v32
  %v108 = vunpack.c.l.b16 %v33
  %v109 = vunpack.c.l.b16 %v34
  %v110 = vunpack.c.l.b16 %v35
  %v111 = vunpack.c.l.b16 %v36
  %v112 = vunpack.c.l.b16 %v37
  %v113 = vunpack.c.l.b16 %v38
  %v114 = vunpack.c.l.b16 %v39
  %v115 = vunpack.c.l.b16 %v40
  %v116 = vunpack.c.l.b16 %v41
  %v117 = vunpack.c.l.b16 %v42
  %v118 = vpack.c.b16 %v103, %v102
  %v119 = vpack.c.b16 %v105, %v104
  %v120 = vpack.c.b16 %v107, %v106
  %v121 = vpack.c.b16 %v109, %v108
  %v122 = vpack.c.b16 %v111, %v110
  %v123 = vpack.c.b16 %v113, %v112
  %v124 = vpack.c.b16 %v115, %v114
  %v125 = vpack.c.b16 %v117, %v116
  %134 = vmatprep.subr.bf16.mxu0 0
  %135 = vmatpush1.bf16.msra.mxu0 %v118
  %136 = vmatprep.subr.bf16.mxu0 0
  %137 = vmatpush1.bf16.msra.mxu0 %v119
  %138 = vmatprep.subr.bf16.mxu0 0
  %139 = vmatpush1.bf16.msra.mxu0 %v120
  %140 = vmatprep.subr.bf16.mxu0 0
  %141 = vmatpush1.bf16.msra.mxu0 %v121
  %142 = vmatprep.subr.bf16.mxu0 0
  %143 = vmatpush1.bf16.msra.mxu0 %v122
  %144 = vmatprep.subr.bf16.mxu0 0
  %145 = vmatpush1.bf16.msra.mxu0 %v123
  %146 = vmatprep.subr.bf16.mxu0 0
  %147 = vmatpush1.bf16.msra.mxu0 %v124
  %148 = vmatprep.subr.bf16.mxu0 0
  %149 = vmatpush1.bf16.msra.mxu0 %v125
  %150 = vmatprep.subr.bf16.mxu0 0
  %151 = vmatpush1.bf16.msra.mxu0 0
  %152 = vmatprep.subr.bf16.mxu0 0
  %153 = vmatpush1.bf16.msra.mxu0 0
  %154 = vmatprep.subr.bf16.mxu0 0
  %155 = vmatpush1.bf16.msra.mxu0 0
  %156 = vmatprep.subr.bf16.mxu0 0
  %157 = vmatpush1.bf16.msra.mxu0 0
  %158 = vmatprep.subr.bf16.mxu0 0
  %159 = vmatpush1.bf16.msra.mxu0 0
  %160 = vmatprep.subr.bf16.mxu0 0
  %161 = vmatpush1.bf16.msra.mxu0 0
  %162 = vmatprep.subr.bf16.mxu0 0
  %163 = vmatpush1.bf16.msra.mxu0 0
  %164 = vmatprep.subr.bf16.mxu0 0
  %165 = vmatpush1.bf16.msra.mxu0 0
  %166 = vmatprep.mubr.bf16.mxu0 0
  %167 = vmatmul.mubr.bf16.gmra.mrb[0].mxu0 %v74
  %v168 = vpop.f32.mrb[0].mxu0
  %v169 = vadd.f32 %v48, %v168
  %v170 = vpop.f32.mrb[0].mxu0
  %v171 = vpop.f32.mrb[0].mxu0
  %v172 = vadd.f32 %v48, %v171
  %v173 = vpop.f32.mrb[0].mxu0
  %174 = vmatprep.mubr.bf16.mxu0 0
  %175 = vmatmul.mubr.bf16.gmra.mrb[0].mxu0 %v75
  %v176 = vpop.f32.mrb[0].mxu0
  %v177 = vadd.f32 %v48, %v176
  %v178 = vpop.f32.mrb[0].mxu0
  %v179 = vpop.f32.mrb[0].mxu0
  %v180 = vadd.f32 %v48, %v179
  %v181 = vpop.f32.mrb[0].mxu0
  %182 = vmatprep.mubr.bf16.mxu0 0
  %183 = vmatmul.mubr.bf16.gmra.mrb[0].mxu0 %v76
  %v184 = vpop.f32.mrb[0].mxu0
  %v185 = vadd.f32 %v48, %v184
  %v186 = vpop.f32.mrb[0].mxu0
  %v187 = vpop.f32.mrb[0].mxu0
  %v188 = vadd.f32 %v48, %v187
  %v189 = vpop.f32.mrb[0].mxu0
  %190 = vmatprep.mubr.bf16.mxu0 0
  %191 = vmatmul.mubr.bf16.gmra.mrb[0].mxu0 %v77
  %v192 = vpop.f32.mrb[0].mxu0
  %v193 = vadd.f32 %v48, %v192
  %v194 = vpop.f32.mrb[0].mxu0
  %v195 = vpop.f32.mrb[0].mxu0
  %v196 = vadd.f32 %v48, %v195
  %v197 = vpop.f32.mrb[0].mxu0
  %198 = vmatprep.mubr.bf16.mxu0 0
  %199 = vmatmul.mubr.bf16.gmra.mrb[0].mxu0 %v78
  %v200 = vpop.f32.mrb[0].mxu0
  %v201 = vadd.f32 %v48, %v200
  %v202 = vpop.f32.mrb[0].mxu0
  %v203 = vpop.f32.mrb[0].mxu0
  %v204 = vadd.f32 %v48, %v203
  %v205 = vpop.f32.mrb[0].mxu0
  %206 = vmatprep.mubr.bf16.mxu0 0
  %207 = vmatmul.mubr.bf16.gmra.mrb[0].mxu0 %v79
  %v208 = vpop.f32.mrb[0].mxu0
  %v209 = vadd.f32 %v48, %v208
  %v210 = vpop.f32.mrb[0].mxu0
  %v211 = vpop.f32.mrb[0].mxu0
  %v212 = vadd.f32 %v48, %v211
  %v213 = vpop.f32.mrb[0].mxu0
  %214 = vdwg.mxu0
  %v215 = vmax.f32 %v169, 0.0
  %v216 = vmax.f32 %v172, 0.0
  %v217 = vmax.f32 %v177, 0.0
  %v218 = vmax.f32 %v180, 0.0
  %v219 = vmax.f32 %v185, 0.0
  %v220 = vmax.f32 %v188, 0.0
  %v221 = vmax.f32 %v193, 0.0
  %v222 = vmax.f32 %v196, 0.0
  %v223 = vmax.f32 %v201, 0.0
  %v224 = vmax.f32 %v204, 0.0
  %v225 = vmax.f32 %v209, 0.0
  %v226 = vmax.f32 %v212, 0.0
  %227 = vst [vmem:[%s3] sm:$0xff] %v215
  %228 = vst [vmem:[%s3 + $0x8] sm:$0xff] %v216
  %229 = vst [vmem:[%s3 + $0x10] sm:$0xff] %v217
  %230 = vst [vmem:[%s3 + $0x18] sm:$0xff] %v218
  %231 = vst [vmem:[%s3 + $0x20] sm:$0xff] %v219
  %232 = vst [vmem:[%s3 + $0x28] sm:$0xff] %v220
  %233 = vst [vmem:[%s3 + $0x30] sm:$0xff] %v221
  %234 = vst [vmem:[%s3 + $0x38] sm:$0xff] %v222
  %235 = vst [vmem:[%s3 + $0x40] sm:$0xff] %v223
  %236 = vst [vmem:[%s3 + $0x48] sm:$0xff] %v224
  %237 = vst [vmem:[%s3 + $0x50] sm:$0xff] %v225
  %238 = vst [vmem:[%s3 + $0x58] sm:$0xff] %v226
  // Predicated region
  $region14: #{_lambda_.10} parent=0 // pred_check
    _
  $region15: #{_lambda_.10} parent=0 // pred_check_branch
    %240 = sbr.rel (0) target = $region17
  $region16: #{_lambda_.10} parent=0 // pred_region
    _
  $region17: #{_lambda_.10} parent=0 // pred_fallthru
    _
  // Predicated region
  $region18: #{_lambda_.10} parent=0 // pred_check
    _
  $region19: #{_lambda_.10} parent=0 // pred_check_branch
    %242 = sbr.rel (0) target = $region21
  $region20: #{_lambda_.10} parent=0 // pred_region
    _
  $region21: #{_lambda_.10} parent=0 // pred_fallthru
    _

// kernel: _lambda_.11
$region0: #{_lambda_.11}
  #allocation0 [shape = 'u32[]', space=smem, size = 0x4, offset = 0x4, fixed_abs, tag = 'smem constant byte address 0x4 - core index']
  #allocation1 [shape = 'u32[144,128]{1,0:T(1,128)}', space=vmem, size = 0x12000, scoped, tag = 'internal scratch']
  %s0 = inlined_call_operand.vmem [shape: bf16[96,128], index: 0, kind: input, shape index: {}]
  %s1 = inlined_call_operand.vmem [shape: bf16[128,128], index: 1, kind: input, shape index: {}]
  %s2 = inlined_call_operand.vmem [shape: f32[1,128], index: 2, kind: input, shape index: {}]
  %s3 = inlined_call_operand.vmem [shape: f32[8,96], index: 3, kind: input, shape index: {}]
  %s4 = inlined_call_operand.vmem [shape: f32[8,128], index: 4, kind: output, shape index: {}]
  %s5 = sld [smem:[#allocation0]]
  $region26: #{_lambda_.11} parent=0
    _
  %s7 = ssub.s32 1, %s5
  %s8 = scalar_select 0, %s7, %s5
  // Predicated region
  $region2: #{_lambda_.11} parent=0 // pred_check
    _
  $region3: #{_lambda_.11} parent=0 // pred_check_branch
    %10 = sbr.rel (0) target = $region5
  $region4: #{_lambda_.11} parent=0 // pred_region
    _
  $region5: #{_lambda_.11} parent=0 // pred_fallthru
    _
  // Predicated region
  $region6: #{_lambda_.11} parent=0 // pred_check
    _
  $region7: #{_lambda_.11} parent=0 // pred_check_branch
    %12 = sbr.rel (0) target = $region9
  $region8: #{_lambda_.11} parent=0 // pred_region
    _
  $region9: #{_lambda_.11} parent=0 // pred_fallthru
    _
  // Predicated region
  $region10: #{_lambda_.11} parent=0 // pred_check
    _
  $region11: #{_lambda_.11} parent=0 // pred_check_branch
    %14 = sbr.rel (0) target = $region13
  $region12: #{_lambda_.11} parent=0 // pred_region
    _
  $region13: #{_lambda_.11} parent=0 // pred_fallthru
    _
  // Predicated region
  $region14: #{_lambda_.11} parent=0 // pred_check
    _
  $region15: #{_lambda_.11} parent=0 // pred_check_branch
    %16 = sbr.rel (0) target = $region17
  $region16: #{_lambda_.11} parent=0 // pred_region
    _
  $region17: #{_lambda_.11} parent=0 // pred_fallthru
    _
  %v18 = vld [vmem:[%s0] sm:$0xf]
  %v19 = vld [vmem:[%s0 + $0x4] sm:$0xf]
  %v20 = vld [vmem:[%s0 + $0x8] sm:$0xf]
  %v21 = vld [vmem:[%s0 + $0xc] sm:$0xf]
  %v22 = vld [vmem:[%s0 + $0x10] sm:$0xf]
  %v23 = vld [vmem:[%s0 + $0x14] sm:$0xf]
  %v24 = vld [vmem:[%s0 + $0x18] sm:$0xf]
  %v25 = vld [vmem:[%s0 + $0x1c] sm:$0xf]
  %v26 = vld [vmem:[%s0 + $0x20] sm:$0xf]
  %v27 = vld [vmem:[%s0 + $0x24] sm:$0xf]
  %v28 = vld [vmem:[%s0 + $0x28] sm:$0xf]
  %v29 = vld [vmem:[%s0 + $0x2c] sm:$0xf]
  %v30 = vld [vmem:[%s1] sm:$0xf]
  %v31 = vld [vmem:[%s1 + $0x4] sm:$0xf]
  %v32 = vld [vmem:[%s1 + $0x8] sm:$0xf]
  %v33 = vld [vmem:[%s1 + $0xc] sm:$0xf]
  %v34 = vld [vmem:[%s1 + $0x10] sm:$0xf]
  %v35 = vld [vmem:[%s1 + $0x14] sm:$0xf]
  %v36 = vld [vmem:[%s1 + $0x18] sm:$0xf]
  %v37 = vld [vmem:[%s1 + $0x1c] sm:$0xf]
  %v38 = vld [vmem:[%s1 + $0x20] sm:$0xf]
  %v39 = vld [vmem:[%s1 + $0x24] sm:$0xf]
  %v40 = vld [vmem:[%s1 + $0x28] sm:$0xf]
  %v41 = vld [vmem:[%s1 + $0x2c] sm:$0xf]
  %v42 = vld [vmem:[%s1 + $0x30] sm:$0xf]
  %v43 = vld [vmem:[%s1 + $0x34] sm:$0xf]
  %v44 = vld [vmem:[%s1 + $0x38] sm:$0xf]
  %v45 = vld [vmem:[%s1 + $0x3c] sm:$0xf]
  %v46 = vld [vmem:[%s2] sm:$0x1]
  %v48 = vlaneseq
  %v49 = vshrl.u32 %v48, 7
  %v50 = vsub.s32 0, %v49
  %v51 = vrot.slane %v46, %v50
  %v65 = vunpack.c.l.b16 %v18
  %v66 = vunpack.c.l.b16 %v19
  %v67 = vunpack.c.l.b16 %v20
  %v68 = vunpack.c.l.b16 %v21
  %v69 = vunpack.c.l.b16 %v22
  %v70 = vunpack.c.l.b16 %v23
  %v71 = vunpack.c.l.b16 %v24
  %v72 = vunpack.c.l.b16 %v25
  %v73 = vunpack.c.l.b16 %v26
  %v74 = vunpack.c.l.b16 %v27
  %v75 = vunpack.c.l.b16 %v28
  %v76 = vunpack.c.l.b16 %v29
  %v77 = vpack.c.b16 %v66, %v65
  %v78 = vpack.c.b16 %v68, %v67
  %v79 = vpack.c.b16 %v70, %v69
  %v80 = vpack.c.b16 %v72, %v71
  %v81 = vpack.c.b16 %v74, %v73
  %v82 = vpack.c.b16 %v76, %v75
  %v105 = vunpack.c.l.b16 %v30
  %v106 = vunpack.c.l.b16 %v31
  %v107 = vunpack.c.l.b16 %v32
  %v108 = vunpack.c.l.b16 %v33
  %v109 = vunpack.c.l.b16 %v34
  %v110 = vunpack.c.l.b16 %v35
  %v111 = vunpack.c.l.b16 %v36
  %v112 = vunpack.c.l.b16 %v37
  %v113 = vunpack.c.l.b16 %v38
  %v114 = vunpack.c.l.b16 %v39
  %v115 = vunpack.c.l.b16 %v40
  %v116 = vunpack.c.l.b16 %v41
  %v117 = vunpack.c.l.b16 %v42
  %v118 = vunpack.c.l.b16 %v43
  %v119 = vunpack.c.l.b16 %v44
  %v120 = vunpack.c.l.b16 %v45
  %v121 = vpack.c.b16 %v106, %v105
  %v122 = vpack.c.b16 %v108, %v107
  %v123 = vpack.c.b16 %v110, %v109
  %v124 = vpack.c.b16 %v112, %v111
  %v125 = vpack.c.b16 %v114, %v113
  %v126 = vpack.c.b16 %v116, %v115
  %v127 = vpack.c.b16 %v118, %v117
  %v128 = vpack.c.b16 %v120, %v119
  %137 = vmatprep.subr.bf16.mxu0 0
  %138 = vmatpush1.bf16.msra.mxu0 %v121
  %139 = vmatprep.subr.bf16.mxu0 0
  %140 = vmatpush1.bf16.msra.mxu0 %v122
  %141 = vmatprep.subr.bf16.mxu0 0
  %142 = vmatpush1.bf16.msra.mxu0 %v123
  %143 = vmatprep.subr.bf16.mxu0 0
  %144 = vmatpush1.bf16.msra.mxu0 %v124
  %145 = vmatprep.subr.bf16.mxu0 0
  %146 = vmatpush1.bf16.msra.mxu0 %v125
  %147 = vmatprep.subr.bf16.mxu0 0
  %148 = vmatpush1.bf16.msra.mxu0 %v126
  %149 = vmatprep.subr.bf16.mxu0 0
  %150 = vmatpush1.bf16.msra.mxu0 %v127
  %151 = vmatprep.subr.bf16.mxu0 0
  %152 = vmatpush1.bf16.msra.mxu0 %v128
  %153 = vmatprep.subr.bf16.mxu0 0
  %154 = vmatpush1.bf16.msra.mxu0 0
  %155 = vmatprep.subr.bf16.mxu0 0
  %156 = vmatpush1.bf16.msra.mxu0 0
  %157 = vmatprep.subr.bf16.mxu0 0
  %158 = vmatpush1.bf16.msra.mxu0 0
  %159 = vmatprep.subr.bf16.mxu0 0
  %160 = vmatpush1.bf16.msra.mxu0 0
  %161 = vmatprep.subr.bf16.mxu0 0
  %162 = vmatpush1.bf16.msra.mxu0 0
  %163 = vmatprep.subr.bf16.mxu0 0
  %164 = vmatpush1.bf16.msra.mxu0 0
  %165 = vmatprep.subr.bf16.mxu0 0
  %166 = vmatpush1.bf16.msra.mxu0 0
  %167 = vmatprep.subr.bf16.mxu0 0
  %168 = vmatpush1.bf16.msra.mxu0 0
  %169 = vmatprep.mubr.bf16.mxu0 0
  %170 = vmatmul.mubr.bf16.gmra.mrb[0].mxu0 %v77
  %v171 = vpop.f32.mrb[0].mxu0
  %v172 = vadd.f32 %v51, %v171
  %v173 = vpop.f32.mrb[0].mxu0
  %v174 = vpop.f32.mrb[0].mxu0
  %v175 = vadd.f32 %v51, %v174
  %v176 = vpop.f32.mrb[0].mxu0
  %177 = vmatprep.mubr.bf16.mxu0 0
  %178 = vmatmul.mubr.bf16.gmra.mrb[0].mxu0 %v78
  %v179 = vpop.f32.mrb[0].mxu0
  %v180 = vadd.f32 %v51, %v179
  %v181 = vpop.f32.mrb[0].mxu0
  %v182 = vpop.f32.mrb[0].mxu0
  %v183 = vadd.f32 %v51, %v182
  %v184 = vpop.f32.mrb[0].mxu0
  %185 = vmatprep.mubr.bf16.mxu0 0
  %186 = vmatmul.mubr.bf16.gmra.mrb[0].mxu0 %v79
  %v187 = vpop.f32.mrb[0].mxu0
  %v188 = vadd.f32 %v51, %v187
  %v189 = vpop.f32.mrb[0].mxu0
  %v190 = vpop.f32.mrb[0].mxu0
  %v191 = vadd.f32 %v51, %v190
  %v192 = vpop.f32.mrb[0].mxu0
  %193 = vmatprep.mubr.bf16.mxu0 0
  %194 = vmatmul.mubr.bf16.gmra.mrb[0].mxu0 %v80
  %v195 = vpop.f32.mrb[0].mxu0
  %v196 = vadd.f32 %v51, %v195
  %v197 = vpop.f32.mrb[0].mxu0
  %v198 = vpop.f32.mrb[0].mxu0
  %v199 = vadd.f32 %v51, %v198
  %v200 = vpop.f32.mrb[0].mxu0
  %201 = vmatprep.mubr.bf16.mxu0 0
  %202 = vmatmul.mubr.bf16.gmra.mrb[0].mxu0 %v81
  %v203 = vpop.f32.mrb[0].mxu0
  %v204 = vadd.f32 %v51, %v203
  %v205 = vpop.f32.mrb[0].mxu0
  %v206 = vpop.f32.mrb[0].mxu0
  %v207 = vadd.f32 %v51, %v206
  %v208 = vpop.f32.mrb[0].mxu0
  %209 = vmatprep.mubr.bf16.mxu0 0
  %210 = vmatmul.mubr.bf16.gmra.mrb[0].mxu0 %v82
  %v211 = vpop.f32.mrb[0].mxu0
  %v212 = vadd.f32 %v51, %v211
  %v213 = vpop.f32.mrb[0].mxu0
  %v214 = vpop.f32.mrb[0].mxu0
  %v215 = vadd.f32 %v51, %v214
  %v216 = vpop.f32.mrb[0].mxu0
  %217 = vdwg.mxu0
  %v218 = vmax.f32 %v172, 0.0
  %v219 = vmax.f32 %v175, 0.0
  %v220 = vmax.f32 %v180, 0.0
  %v221 = vmax.f32 %v183, 0.0
  %v222 = vmax.f32 %v188, 0.0
  %v223 = vmax.f32 %v191, 0.0
  %v224 = vmax.f32 %v196, 0.0
  %v225 = vmax.f32 %v199, 0.0
  %v226 = vmax.f32 %v204, 0.0
  %v227 = vmax.f32 %v207, 0.0
  %v228 = vmax.f32 %v212, 0.0
  %v229 = vmax.f32 %v215, 0.0
  %v230 = vld [vmem:[%s3] sm:$0xff]
  %vm231 = vcmask 785408
  %v233 = vsel %vm231, %v230, 0
  %235 = vmatprep.subr.mxu0 0.0
  %236 = vmatpush1.msra.mxu0 %v218
  %237 = vmatprep.subr.mxu0 0.0
  %238 = vmatpush1.msra.mxu0 %v219
  %239 = vmatprep.subr.mxu0 0.0
  %240 = vmatpush1.msra.mxu0 %v220
  %241 = vmatprep.subr.mxu0 0.0
  %242 = vmatpush1.msra.mxu0 %v221
  %243 = vmatprep.subr.mxu0 0.0
  %244 = vmatpush1.msra.mxu0 %v222
  %245 = vmatprep.subr.mxu0 0.0
  %246 = vmatpush1.msra.mxu0 %v223
  %247 = vmatprep.subr.mxu0 0.0
  %248 = vmatpush1.msra.mxu0 %v224
  %249 = vmatprep.subr.mxu0 0.0
  %250 = vmatpush1.msra.mxu0 %v225
  %251 = vmatprep.subr.mxu0 0.0
  %252 = vmatpush1.msra.mxu0 %v226
  %253 = vmatprep.subr.mxu0 0.0
  %254 = vmatpush1.msra.mxu0 %v227
  %255 = vmatprep.subr.mxu0 0.0
  %256 = vmatpush1.msra.mxu0 %v228
  %257 = vmatprep.subr.mxu0 0.0
  %258 = vmatpush1.msra.mxu0 %v229
  %259 = vmatprep.subr.mxu0 0.0
  %260 = vmatpush1.msra.mxu0 0.0
  %261 = vmatprep.subr.mxu0 0.0
  %262 = vmatpush1.msra.mxu0 0.0
  %263 = vmatprep.subr.mxu0 0.0
  %264 = vmatpush1.msra.mxu0 0.0
  %265 = vmatprep.subr.mxu0 0.0
  %266 = vmatpush1.msra.mxu0 0.0
  %267 = vmatprep.subr.mxu0 0.0
  %268 = vmatpush1.msra.mxu0 0.0
  %269 = vmatprep.subr.mxu0 0.0
  %270 = vmatpush1.msra.mxu0 0.0
  %271 = vmatprep.subr.mxu0 0.0
  %272 = vmatpush1.msra.mxu0 0.0
  %273 = vmatprep.subr.mxu0 0.0
  %274 = vmatpush1.msra.mxu0 0.0
  %275 = vmatprep.subr.mxu0 0.0
  %276 = vmatpush1.msra.mxu0 0.0
  %277 = vmatprep.subr.mxu0 0.0
  %278 = vmatpush1.msra.mxu0 0.0
  %279 = vmatprep.subr.mxu0 0.0
  %280 = vmatpush1.msra.mxu0 0.0
  %281 = vmatprep.subr.mxu0 0.0
  %282 = vmatpush1.msra.mxu0 0.0
  %283 = vmatprep.subr.mxu0 0.0
  %284 = vmatpush1.msra.mxu0 0.0
  %285 = vmatprep.subr.mxu0 0.0
  %286 = vmatpush1.msra.mxu0 0.0
  %287 = vmatprep.subr.mxu0 0.0
  %288 = vmatpush1.msra.mxu0 0.0
  %289 = vmatprep.subr.mxu0 0.0
  %290 = vmatpush1.msra.mxu0 0.0
  %291 = vmatprep.subr.mxu0 0.0
  %292 = vmatpush1.msra.mxu0 0.0
  %293 = vmatprep.subr.mxu0 0.0
  %294 = vmatpush1.msra.mxu0 0.0
  %295 = vmatprep.subr.mxu0 0.0
  %296 = vmatpush1.msra.mxu0 0.0
  %297 = vmatprep.subr.mxu0 0.0
  %298 = vmatpush1.msra.mxu0 0.0
  %299 = vmatprep.mubr.f32.mxu0 0.0
  %300 = vmatmul.mubr.f32.gmra.mrb[0].mxu0 %v233
  %v301 = vpop.f32.mrb[0].mxu0
  %v302 = vadd.f32 0.0, %v301
  %v303 = vpop.f32.mrb[0].mxu0
  %304 = vdwg.mxu0
  %305 = vst [vmem:[%s4] sm:$0xff] %v302
  // Predicated region
  $region18: #{_lambda_.11} parent=0 // pred_check
    _
  $region19: #{_lambda_.11} parent=0 // pred_check_branch
    %307 = sbr.rel (0) target = $region21
  $region20: #{_lambda_.11} parent=0 // pred_region
    _
  $region21: #{_lambda_.11} parent=0 // pred_fallthru
    _
  // Predicated region
  $region22: #{_lambda_.11} parent=0 // pred_check
    _
  $region23: #{_lambda_.11} parent=0 // pred_check_branch
    %309 = sbr.rel (0) target = $region25
  $region24: #{_lambda_.11} parent=0 // pred_region
    _
  $region25: #{_lambda_.11} parent=0 // pred_fallthru
    _

// kernel: _lambda_.9
$region0: #{_lambda_.9}
  #allocation0 [shape = 'u32[]', space=smem, size = 0x4, offset = 0x4, fixed_abs, tag = 'smem constant byte address 0x4 - core index']
  #allocation1 [shape = 'u32[144,128]{1,0:T(1,128)}', space=vmem, size = 0x12000, scoped, tag = 'internal scratch']
  #allocation2 [shape = 'f32[32,1]{1,0:T(8,128)}', space=vmem, size = 0x4000, scoped, tag = 'scratch operand']
  #allocation3 [shape = 'f32[32,1]{1,0:T(8,128)}', space=vmem, size = 0x4000, scoped, tag = 'scratch operand']
  #allocation4 [shape = 'f32[32,1]{1,0:T(8,128)}', space=vmem, size = 0x4000, scoped, tag = 'scratch operand']
  %s0 = inlined_call_operand.vmem [shape: bf16[32,128], index: 0, kind: input, shape index: {}]
  %s1 = inlined_call_operand.vmem [shape: bf16[128,256], index: 1, kind: input, shape index: {}]
  %s2 = inlined_call_operand.vmem [shape: s32[32,1], index: 2, kind: input, shape index: {}]
  %s3 = inlined_call_operand.vmem [shape: f32[1,8,128], index: 3, kind: output, shape index: {}]
  %s4 = sld [smem:[#allocation0]]
  $region30: #{_lambda_.9} parent=0
    _
  %s6 = ssub.s32 1, %s4
  %s7 = scalar_select 0, %s6, %s4
  // Predicated region
  $region2: #{_lambda_.9} parent=0 // pred_check
    _
  $region3: #{_lambda_.9} parent=0 // pred_check_branch
    %9 = sbr.rel (0) target = $region5
  $region4: #{_lambda_.9} parent=0 // pred_region
    _
  $region5: #{_lambda_.9} parent=0 // pred_fallthru
    _
  // Predicated region
  $region6: #{_lambda_.9} parent=0 // pred_check
    _
  $region7: #{_lambda_.9} parent=0 // pred_check_branch
    %11 = sbr.rel (0) target = $region9
  $region8: #{_lambda_.9} parent=0 // pred_region
    _
  $region9: #{_lambda_.9} parent=0 // pred_fallthru
    _
  // Predicated region
  $region10: #{_lambda_.9} parent=0 // pred_check
    _
  $region11: #{_lambda_.9} parent=0 // pred_check_branch
    %13 = sbr.rel (0) target = $region13
  $region12: #{_lambda_.9} parent=0 // pred_region
    _
  $region13: #{_lambda_.9} parent=0 // pred_fallthru
    _
  %p15 = scmp.eq.s32.totalorder 0, 0
  // Predicated region
  $region14: #{_lambda_.9} parent=0 // pred_check
    %p16 = pneg %p15
  $region15: #{_lambda_.9} parent=0 // pred_check_branch
    %18 = sbr.rel (%p16) target = $region17
  $region16: #{_lambda_.9} parent=0 // pred_region
    %vm19 = vcmask 7168
    %20 = vst.msk [vmem:[#allocation2] sm:$0xff] %vm19, -inf
    %21 = vst.msk [vmem:[#allocation2 + $0x8] sm:$0xff] %vm19, -inf
    %22 = vst.msk [vmem:[#allocation2 + $0x10] sm:$0xff] %vm19, -inf
    %23 = vst.msk [vmem:[#allocation2 + $0x18] sm:$0xff] %vm19, -inf
    %24 = vst.msk [vmem:[#allocation3] sm:$0xff] %vm19, 0.0
    %25 = vst.msk [vmem:[#allocation3 + $0x8] sm:$0xff] %vm19, 0.0
    %26 = vst.msk [vmem:[#allocation3 + $0x10] sm:$0xff] %vm19, 0.0
    %27 = vst.msk [vmem:[#allocation3 + $0x18] sm:$0xff] %vm19, 0.0
    %28 = vst.msk [vmem:[#allocation4] sm:$0xff] %vm19, 0.0
    %29 = vst.msk [vmem:[#allocation4 + $0x8] sm:$0xff] %vm19, 0.0
    %30 = vst.msk [vmem:[#allocation4 + $0x10] sm:$0xff] %vm19, 0.0
    %31 = vst.msk [vmem:[#allocation4 + $0x18] sm:$0xff] %vm19, 0.0
  $region17: #{_lambda_.9} parent=0 // pred_fallthru
    _
  %v32 = vld [vmem:[%s0] sm:$0xf]
  %v33 = vld [vmem:[%s0 + $0x4] sm:$0xf]
  %v34 = vld [vmem:[%s0 + $0x8] sm:$0xf]
  %v35 = vld [vmem:[%s0 + $0xc] sm:$0xf]
  %v36 = vld [vmem:[%s1] sm:$0xff]
  %v37 = vld [vmem:[%s1 + $0x8] sm:$0xff]
  %v38 = vld [vmem:[%s1 + $0x10] sm:$0xff]
  %v39 = vld [vmem:[%s1 + $0x18] sm:$0xff]
  %v40 = vld [vmem:[%s1 + $0x20] sm:$0xff]
  %v41 = vld [vmem:[%s1 + $0x28] sm:$0xff]
  %v42 = vld [vmem:[%s1 + $0x30] sm:$0xff]
  %v43 = vld [vmem:[%s1 + $0x38] sm:$0xff]
  %v44 = vld [vmem:[%s1 + $0x40] sm:$0xff]
  %v45 = vld [vmem:[%s1 + $0x48] sm:$0xff]
  %v46 = vld [vmem:[%s1 + $0x50] sm:$0xff]
  %v47 = vld [vmem:[%s1 + $0x58] sm:$0xff]
  %v48 = vld [vmem:[%s1 + $0x60] sm:$0xff]
  %v49 = vld [vmem:[%s1 + $0x68] sm:$0xff]
  %v50 = vld [vmem:[%s1 + $0x70] sm:$0xff]
  %v51 = vld [vmem:[%s1 + $0x78] sm:$0xff]
  %v56 = vunpack.c.l.b16 %v32
  %v57 = vunpack.c.l.b16 %v33
  %v58 = vunpack.c.l.b16 %v34
  %v59 = vunpack.c.l.b16 %v35
  %v60 = vpack.c.b16 %v57, %v56
  %v61 = vpack.c.b16 %v59, %v58
  %v80 = vunpack.c.l.b16 %v36
  %v81 = vunpack.c.h.b16 %v36
  %v82 = vunpack.c.l.b16 %v37
  %v83 = vunpack.c.h.b16 %v37
  %v84 = vunpack.c.l.b16 %v38
  %v85 = vunpack.c.h.b16 %v38
  %v86 = vunpack.c.l.b16 %v39
  %v87 = vunpack.c.h.b16 %v39
  %v88 = vunpack.c.l.b16 %v40
  %v89 = vunpack.c.h.b16 %v40
  %v90 = vunpack.c.l.b16 %v41
  %v91 = vunpack.c.h.b16 %v41
  %v92 = vunpack.c.l.b16 %v42
  %v93 = vunpack.c.h.b16 %v42
  %v94 = vunpack.c.l.b16 %v43
  %v95 = vunpack.c.h.b16 %v43
  %v96 = vunpack.c.l.b16 %v44
  %v97 = vunpack.c.h.b16 %v44
  %v98 = vunpack.c.l.b16 %v45
  %v99 = vunpack.c.h.b16 %v45
  %v100 = vunpack.c.l.b16 %v46
  %v101 = vunpack.c.h.b16 %v46
  %v102 = vunpack.c.l.b16 %v47
  %v103 = vunpack.c.h.b16 %v47
  %v104 = vunpack.c.l.b16 %v48
  %v105 = vunpack.c.h.b16 %v48
  %v106 = vunpack.c.l.b16 %v49
  %v107 = vunpack.c.h.b16 %v49
  %v108 = vunpack.c.l.b16 %v50
  %v109 = vunpack.c.h.b16 %v50
  %v110 = vunpack.c.l.b16 %v51
  %v111 = vunpack.c.h.b16 %v51
  %v112 = vpack.c.b16 %v82, %v80
  %v113 = vpack.c.b16 %v83, %v81
  %v114 = vpack.c.b16 %v86, %v84
  %v115 = vpack.c.b16 %v87, %v85
  %v116 = vpack.c.b16 %v90, %v88
  %v117 = vpack.c.b16 %v91, %v89
  %v118 = vpack.c.b16 %v94, %v92
  %v119 = vpack.c.b16 %v95, %v93
  %v120 = vpack.c.b16 %v98, %v96
  %v121 = vpack.c.b16 %v99, %v97
  %v122 = vpack.c.b16 %v102, %v100
  %v123 = vpack.c.b16 %v103, %v101
  %v124 = vpack.c.b16 %v106, %v104
  %v125 = vpack.c.b16 %v107, %v105
  %v126 = vpack.c.b16 %v110, %v108
  %v127 = vpack.c.b16 %v111, %v109
  %144 = vmatprep.subr.bf16.mxu0 %v113
  %145 = vmatpush1.bf16.msra.mxu0 %v112
  %146 = vmatprep.subr.bf16.mxu0 %v115
  %147 = vmatpush1.bf16.msra.mxu0 %v114
  %148 = vmatprep.subr.bf16.mxu0 %v117
  %149 = vmatpush1.bf16.msra.mxu0 %v116
  %150 = vmatprep.subr.bf16.mxu0 %v119
  %151 = vmatpush1.bf16.msra.mxu0 %v118
  %152 = vmatprep.subr.bf16.mxu0 %v121
  %153 = vmatpush1.bf16.msra.mxu0 %v120
  %154 = vmatprep.subr.bf16.mxu0 %v123
  %155 = vmatpush1.bf16.msra.mxu0 %v122
  %156 = vmatprep.subr.bf16.mxu0 %v125
  %157 = vmatpush1.bf16.msra.mxu0 %v124
  %158 = vmatprep.subr.bf16.mxu0 %v127
  %159 = vmatpush1.bf16.msra.mxu0 %v126
  %160 = vmatprep.subr.bf16.mxu0 0
  %161 = vmatpush1.bf16.msra.mxu0 0
  %162 = vmatprep.subr.bf16.mxu0 0
  %163 = vmatpush1.bf16.msra.mxu0 0
  %164 = vmatprep.subr.bf16.mxu0 0
  %165 = vmatpush1.bf16.msra.mxu0 0
  %166 = vmatprep.subr.bf16.mxu0 0
  %167 = vmatpush1.bf16.msra.mxu0 0
  %168 = vmatprep.subr.bf16.mxu0 0
  %169 = vmatpush1.bf16.msra.mxu0 0
  %170 = vmatprep.subr.bf16.mxu0 0
  %171 = vmatpush1.bf16.msra.mxu0 0
  %172 = vmatprep.subr.bf16.mxu0 0
  %173 = vmatpush1.bf16.msra.mxu0 0
  %174 = vmatprep.subr.bf16.mxu0 0
  %175 = vmatpush1.bf16.msra.mxu0 0
  %176 = vmatprep.mubr.bf16.mxu0 0
  %177 = vmatmul.mubr.bf16.gmra.mrb[0].mxu0 %v60
  %v178 = vpop.f32.mrb[0].mxu0
  %v179 = vadd.f32 0.0, %v178
  %v180 = vpop.f32.mrb[0].mxu0
  %v181 = vadd.f32 0.0, %v180
  %v182 = vpop.f32.mrb[0].mxu0
  %v183 = vadd.f32 0.0, %v182
  %v184 = vpop.f32.mrb[0].mxu0
  %v185 = vadd.f32 0.0, %v184
  %186 = vmatprep.mubr.bf16.mxu0 0
  %187 = vmatmul.mubr.bf16.gmra.mrb[0].mxu0 %v61
  %v188 = vpop.f32.mrb[0].mxu0
  %v189 = vadd.f32 0.0, %v188
  %v190 = vpop.f32.mrb[0].mxu0
  %v191 = vadd.f32 0.0, %v190
  %v192 = vpop.f32.mrb[0].mxu0
  %v193 = vadd.f32 0.0, %v192
  %v194 = vpop.f32.mrb[0].mxu0
  %v195 = vadd.f32 0.0, %v194
  %196 = vdwg.mxu0
  %v197 = vld [vmem:[%s2] sm:$0xff]
  %v198 = vld [vmem:[%s2 + $0x8] sm:$0xff]
  %v199 = vld [vmem:[%s2 + $0x10] sm:$0xff]
  %v200 = vld [vmem:[%s2 + $0x18] sm:$0xff]
  %v201 = vlaneseq
  %v202 = vand.u32 %v201, 127
  %v203 = vadd.s32 %v202, 128
  %s204 = smul.u32 0, 256
  %v205 = vstv %s204
  %v206 = vadd.s32 %v202, %v205
  %v207 = vadd.s32 %v203, %v205
  %208 = vset.pattern.permute.xlu0 0
  %209 = vperm.xlu0 %208, %v197
  %v210 = vpop.permute.xlu0 %209
  %211 = vset.pattern.permute.xlu0 0
  %212 = vperm.xlu0 %211, %v198
  %v213 = vpop.permute.xlu0 %212
  %214 = vset.pattern.permute.xlu0 0
  %215 = vperm.xlu0 %214, %v199
  %v216 = vpop.permute.xlu0 %215
  %217 = vset.pattern.permute.xlu0 0
  %218 = vperm.xlu0 %217, %v200
  %v219 = vpop.permute.xlu0 %218
  %vm220 = vcmp.eq.s32.totalorder %v206, %v210
  %vm221 = vcmp.eq.s32.totalorder %v207, %v210
  %vm222 = vcmp.eq.s32.totalorder %v206, %v213
  %vm223 = vcmp.eq.s32.totalorder %v207, %v213
  %vm224 = vcmp.eq.s32.totalorder %v206, %v216
  %vm225 = vcmp.eq.s32.totalorder %v207, %v216
  %vm226 = vcmp.eq.s32.totalorder %v206, %v219
  %vm227 = vcmp.eq.s32.totalorder %v207, %v219
  %v228 = vsel %vm220, 1, 0
  %v229 = vsel %vm221, 1, 0
  %v230 = vsel %vm222, 1, 0
  %v231 = vsel %vm223, 1, 0
  %v232 = vsel %vm224, 1, 0
  %v233 = vsel %vm225, 1, 0
  %v234 = vsel %vm226, 1, 0
  %v235 = vsel %vm227, 1, 0
  %v236 = vcvt.s32.f32 %v228
  %v237 = vcvt.s32.f32 %v229
  %v238 = vcvt.s32.f32 %v230
  %v239 = vcvt.s32.f32 %v231
  %v240 = vcvt.s32.f32 %v232
  %v241 = vcvt.s32.f32 %v233
  %v242 = vcvt.s32.f32 %v234
  %v243 = vcvt.s32.f32 %v235
  %v244 = vld [vmem:[#allocation4] sm:$0xff]
  %v245 = vld [vmem:[#allocation4 + $0x8] sm:$0xff]
  %v246 = vld [vmem:[#allocation4 + $0x10] sm:$0xff]
  %v247 = vld [vmem:[#allocation4 + $0x18] sm:$0xff]
  %v248 = vmul.f32 %v179, %v236
  %v249 = vmul.f32 %v181, %v237
  %v250 = vmul.f32 %v183, %v238
  %v251 = vmul.f32 %v185, %v239
  %v252 = vmul.f32 %v189, %v240
  %v253 = vmul.f32 %v191, %v241
  %v254 = vmul.f32 %v193, %v242
  %v255 = vmul.f32 %v195, %v243
  %v256 = vadd.f32 %v248, %v249
  %257 = vadd.xlane.f32.xlu0 %v256
  %v258 = vpop.xlane.xlu0 %257
  %v259 = vadd.f32 %v250, %v251
  %260 = vadd.xlane.f32.xlu0 %v259
  %v261 = vpop.xlane.xlu0 %260
  %v262 = vadd.f32 %v252, %v253
  %263 = vadd.xlane.f32.xlu0 %v262
  %v264 = vpop.xlane.xlu0 %263
  %v265 = vadd.f32 %v254, %v255
  %266 = vadd.xlane.f32.xlu0 %v265
  %v267 = vpop.xlane.xlu0 %266
  %v268 = vadd.f32 %v244, %v258
  %v269 = vadd.f32 %v245, %v261
  %v270 = vadd.f32 %v246, %v264
  %v271 = vadd.f32 %v247, %v267
  %vm272 = vcmask 7168
  %273 = vst.msk [vmem:[#allocation4] sm:$0xff] %vm272, %v268
  %274 = vst.msk [vmem:[#allocation4 + $0x8] sm:$0xff] %vm272, %v269
  %275 = vst.msk [vmem:[#allocation4 + $0x10] sm:$0xff] %vm272, %v270
  %276 = vst.msk [vmem:[#allocation4 + $0x18] sm:$0xff] %vm272, %v271
  %v277 = vld [vmem:[#allocation2] sm:$0xff]
  %v278 = vld [vmem:[#allocation2 + $0x8] sm:$0xff]
  %v279 = vld [vmem:[#allocation2 + $0x10] sm:$0xff]
  %v280 = vld [vmem:[#allocation2 + $0x18] sm:$0xff]
  %v281 = vmax.f32 %v179, %v181
  %282 = vmax.xlane.f32.xlu0 %v281
  %v283 = vpop.xlane.xlu0 %282
  %v284 = vmax.f32 %v183, %v185
  %285 = vmax.xlane.f32.xlu0 %v284
  %v286 = vpop.xlane.xlu0 %285
  %v287 = vmax.f32 %v189, %v191
  %288 = vmax.xlane.f32.xlu0 %v287
  %v289 = vpop.xlane.xlu0 %288
  %v290 = vmax.f32 %v193, %v195
  %291 = vmax.xlane.f32.xlu0 %v290
  %v292 = vpop.xlane.xlu0 %291
  %v293 = vmax.f32 %v277, %v283
  %v294 = vmax.f32 %v278, %v286
  %v295 = vmax.f32 %v279, %v289
  %v296 = vmax.f32 %v280, %v292
  %v297 = vld [vmem:[#allocation3] sm:$0xff]
  %v298 = vld [vmem:[#allocation3 + $0x8] sm:$0xff]
  %v299 = vld [vmem:[#allocation3 + $0x10] sm:$0xff]
  %v300 = vld [vmem:[#allocation3 + $0x18] sm:$0xff]
  %v301 = vsub.f32 %v277, %v293
  %v302 = vsub.f32 %v278, %v294
  %v303 = vsub.f32 %v279, %v295
  %v304 = vsub.f32 %v280, %v296
  %v305 = vmul.f32 %v301, 1.442695
  %v306 = vpow.pop %v305
  %v307 = vmul.f32 %v302, 1.442695
  %v308 = vpow.pop %v307
  %v309 = vmul.f32 %v303, 1.442695
  %v310 = vpow.pop %v309
  %v311 = vmul.f32 %v304, 1.442695
  %v312 = vpow.pop %v311
  %v313 = vmul.f32 %v297, %v306
  %v314 = vmul.f32 %v298, %v308
  %v315 = vmul.f32 %v299, %v310
  %v316 = vmul.f32 %v300, %v312
  %318 = vset.pattern.permute.xlu0 0
  %319 = vperm.xlu0 %318, %v293
  %v320 = vpop.permute.xlu0 %319
  %323 = vset.pattern.permute.xlu0 0
  %324 = vperm.xlu0 %323, %v294
  %v325 = vpop.permute.xlu0 %324
  %328 = vset.pattern.permute.xlu0 0
  %329 = vperm.xlu0 %328, %v295
  %v330 = vpop.permute.xlu0 %329
  %333 = vset.pattern.permute.xlu0 0
  %334 = vperm.xlu0 %333, %v296
  %v335 = vpop.permute.xlu0 %334
  %v337 = vsub.f32 %v179, %v320
  %v338 = vsub.f32 %v181, %v320
  %v339 = vsub.f32 %v183, %v325
  %v340 = vsub.f32 %v185, %v325
  %v341 = vsub.f32 %v189, %v330
  %v342 = vsub.f32 %v191, %v330
  %v343 = vsub.f32 %v193, %v335
  %v344 = vsub.f32 %v195, %v335
  %v345 = vmul.f32 %v337, 1.442695
  %v346 = vpow.pop %v345
  %v347 = vmul.f32 %v338, 1.442695
  %v348 = vpow.pop %v347
  %v349 = vmul.f32 %v339, 1.442695
  %v350 = vpow.pop %v349
  %v351 = vmul.f32 %v340, 1.442695
  %v352 = vpow.pop %v351
  %v353 = vmul.f32 %v341, 1.442695
  %v354 = vpow.pop %v353
  %v355 = vmul.f32 %v342, 1.442695
  %v356 = vpow.pop %v355
  %v357 = vmul.f32 %v343, 1.442695
  %v358 = vpow.pop %v357
  %v359 = vmul.f32 %v344, 1.442695
  %v360 = vpow.pop %v359
  %v361 = vadd.f32 %v346, %v348
  %362 = vadd.xlane.f32.xlu0 %v361
  %v363 = vpop.xlane.xlu0 %362
  %v364 = vadd.f32 %v350, %v352
  %365 = vadd.xlane.f32.xlu0 %v364
  %v366 = vpop.xlane.xlu0 %365
  %v367 = vadd.f32 %v354, %v356
  %368 = vadd.xlane.f32.xlu0 %v367
  %v369 = vpop.xlane.xlu0 %368
  %v370 = vadd.f32 %v358, %v360
  %371 = vadd.xlane.f32.xlu0 %v370
  %v372 = vpop.xlane.xlu0 %371
  %v373 = vadd.f32 %v313, %v363
  %v374 = vadd.f32 %v314, %v366
  %v375 = vadd.f32 %v315, %v369
  %v376 = vadd.f32 %v316, %v372
  %377 = vst.msk [vmem:[#allocation3] sm:$0xff] %vm272, %v373
  %378 = vst.msk [vmem:[#allocation3 + $0x8] sm:$0xff] %vm272, %v374
  %379 = vst.msk [vmem:[#allocation3 + $0x10] sm:$0xff] %vm272, %v375
  %380 = vst.msk [vmem:[#allocation3 + $0x18] sm:$0xff] %vm272, %v376
  %381 = vst.msk [vmem:[#allocation2] sm:$0xff] %vm272, %v293
  %382 = vst.msk [vmem:[#allocation2 + $0x8] sm:$0xff] %vm272, %v294
  %383 = vst.msk [vmem:[#allocation2 + $0x10] sm:$0xff] %vm272, %v295
  %384 = vst.msk [vmem:[#allocation2 + $0x18] sm:$0xff] %vm272, %v296
  // Predicated region
  $region18: #{_lambda_.9} parent=0 // pred_check
    %p385 = pneg %p15
  $region19: #{_lambda_.9} parent=0 // pred_check_branch
    %387 = sbr.rel (%p385) target = $region21
  $region20: #{_lambda_.9} parent=0 // pred_region
    %v388 = vld [vmem:[#allocation2] sm:$0xff]
    %v389 = vld [vmem:[#allocation2 + $0x8] sm:$0xff]
    %v390 = vld [vmem:[#allocation2 + $0x10] sm:$0xff]
    %v391 = vld [vmem:[#allocation2 + $0x18] sm:$0xff]
    %v392 = vld [vmem:[#allocation3] sm:$0xff]
    %v393 = vld [vmem:[#allocation3 + $0x8] sm:$0xff]
    %v394 = vld [vmem:[#allocation3 + $0x10] sm:$0xff]
    %v395 = vld [vmem:[#allocation3 + $0x18] sm:$0xff]
    %v396 = vlog2.pop %v392
    %v397 = vmul.f32 %v396, 0.6931472
    %v398 = vlog2.pop %v393
    %v399 = vmul.f32 %v398, 0.6931472
    %v400 = vlog2.pop %v394
    %v401 = vmul.f32 %v400, 0.6931472
    %v402 = vlog2.pop %v395
    %v403 = vmul.f32 %v402, 0.6931472
    %v404 = vadd.f32 %v388, %v397
    %v405 = vadd.f32 %v389, %v399
    %v406 = vadd.f32 %v390, %v401
    %v407 = vadd.f32 %v391, %v403
    %vm408 = vcmp.ne.s32.totalorder %v197, 0
    %vm409 = vcmp.ne.s32.totalorder %v198, 0
    %vm410 = vcmp.ne.s32.totalorder %v199, 0
    %vm411 = vcmp.ne.s32.totalorder %v200, 0
    %v412 = vsel %vm408, 1, 0
    %v413 = vsel %vm409, 1, 0
    %v414 = vsel %vm410, 1, 0
    %v415 = vsel %vm411, 1, 0
    %v416 = vcvt.s32.f32 %v412
    %v417 = vcvt.s32.f32 %v413
    %v418 = vcvt.s32.f32 %v414
    %v419 = vcvt.s32.f32 %v415
    %v420 = vld [vmem:[#allocation4] sm:$0xff]
    %v421 = vld [vmem:[#allocation4 + $0x8] sm:$0xff]
    %v422 = vld [vmem:[#allocation4 + $0x10] sm:$0xff]
    %v423 = vld [vmem:[#allocation4 + $0x18] sm:$0xff]
    %v424 = vsub.f32 %v404, %v420
    %v425 = vsub.f32 %v405, %v421
    %v426 = vsub.f32 %v406, %v422
    %v427 = vsub.f32 %v407, %v423
    %v428 = vmul.f32 %v424, %v416
    %v429 = vmul.f32 %v425, %v417
    %v430 = vmul.f32 %v426, %v418
    %v431 = vmul.f32 %v427, %v419
    %v432 = vsel %vm272, %v428, 0.0
    %v433 = vsel %vm272, %v429, 0.0
    %v434 = vadd.f32 %v432, %v433
    %v435 = vsel %vm272, %v430, 0.0
    %v436 = vadd.f32 %v434, %v435
    %v437 = vsel %vm272, %v431, 0.0
    %v438 = vadd.f32 %v436, %v437
    %439 = vadd.xlane.f32.xlu0 %v438
    %v440 = vpop.xlane.xlu0 %439
    %v441 = vrot.slane %v440, 4
    %v442 = vadd.f32 %v440, %v441
    %v443 = vrot.slane %v442, 2
    %v444 = vadd.f32 %v442, %v443
    %v445 = vrot.slane %v444, 1
    %v446 = vadd.f32 %v444, %v445
    %s447 = vtos %v446
    %v448 = vsel %vm272, %v416, 0.0
    %v449 = vsel %vm272, %v417, 0.0
    %v450 = vadd.f32 %v448, %v449
    %v451 = vsel %vm272, %v418, 0.0
    %v452 = vadd.f32 %v450, %v451
    %v453 = vsel %vm272, %v419, 0.0
    %v454 = vadd.f32 %v452, %v453
    %455 = vadd.xlane.f32.xlu0 %v454
    %v456 = vpop.xlane.xlu0 %455
    %v457 = vrot.slane %v456, 4
    %v458 = vadd.f32 %v456, %v457
    %v459 = vrot.slane %v458, 2
    %v460 = vadd.f32 %v458, %v459
    %v461 = vrot.slane %v460, 1
    %v462 = vadd.f32 %v460, %v461
    %s463 = vtos %v462
    %v464 = vlaneseq
    %v465 = vshrl.u32 %v464, 7
    %vm466 = vcmp.eq.s32.totalorder %v465, 0
    %vm467 = vcmp.eq.s32.totalorder %v202, 0
    %vm468 = vmand %vm466, %vm467
    %vm469 = vcmp.eq.s32.totalorder %v202, 1
    %vm470 = vmand %vm466, %vm469
    %v471 = vstv %s463
    %v472 = vsel %vm470, %v471, 0.0
    %v473 = vstv %s447
    %v474 = vsel %vm468, %v473, %v472
    %475 = vst [vmem:[%s3] sm:$0xff] %v474
  $region21: #{_lambda_.9} parent=0 // pred_fallthru
    _
  // Predicated region
  $region22: #{_lambda_.9} parent=0 // pred_check
    _
  $region23: #{_lambda_.9} parent=0 // pred_check_branch
    %477 = sbr.rel (0) target = $region25
  $region24: #{_lambda_.9} parent=0 // pred_region
    _
  $region25: #{_lambda_.9} parent=0 // pred_fallthru
    _
  // Predicated region
  $region26: #{_lambda_.9} parent=0 // pred_check
    _
  $region27: #{_lambda_.9} parent=0 // pred_check_branch
    %479 = sbr.rel (0) target = $region29
  $region28: #{_lambda_.9} parent=0 // pred_region
    _
  $region29: #{_lambda_.9} parent=0 // pred_fallthru
    _

// kernel: _lambda_.13
$region0: #{_lambda_.13}
  #allocation0 [shape = 'u32[]', space=smem, size = 0x4, offset = 0x4, fixed_abs, tag = 'smem constant byte address 0x4 - core index']
  #allocation1 [shape = 'u32[144,128]{1,0:T(1,128)}', space=vmem, size = 0x12000, scoped, tag = 'internal scratch']
  %s0 = inlined_call_operand.vmem [shape: f32[2,1,128], index: 0, kind: input, shape index: {}]
  %s1 = inlined_call_operand.vmem [shape: f32[2,128,128], index: 1, kind: input, shape index: {}]
  %s2 = inlined_call_operand.vmem [shape: f32[2,1,128], index: 2, kind: output, shape index: {}]
  %s3 = sld [smem:[#allocation0]]
  $region41: #{_lambda_.13} parent=0
    _
  %s5 = ssub.s32 1, %s3
  %s6 = scalar_select 0, %s5, %s3
  loop: start=0, step=1, limit=4
  $region2: #{_lambda_.13} parent=0 // loop_pre_header
    _
  $region3: #{_lambda_.13} parent=0 // loop_header
    %s8 = sphi 0, %s12
    %p9 = scmp.ge.s32.totalorder %s8, 4
    %s18 = sphi 0, %s20
    %s21 = sphi 0, %s18
    %s22 = sphi 0, %s21
    %s38 = sphi 0, %s22
    %s44 = sphi 0, %s46
    %s47 = sphi 0, %s44
    %s48 = sphi 0, %s47
    %s64 = sphi 0, %s48
    %s70 = sphi 0, %s72
    %s73 = sphi 0, %s70
    %s74 = sphi 0, %s73
    %s90 = sphi 0, %s74
  $region4: #{_lambda_.13} parent=0 // loop_header_branch
    %11 = sbr.rel (%p9) target = $region8
  $region5: #{_lambda_.13} parent=0 // loop_body
    %s13 = ssub.s32 %s8, 1
    %s14 = ssub.s32 %s8, 2
    %s15 = sadd.s32 %s8, 1
    %s16 = ssub.s32 %s8, %s15
    %p17 = scmp.eq.s32.totalorder %s16, 0
    %s19 = sadd.s32 %s18, 1
    %s20 = scalar_select %p17, %s18, %s19
    %p23 = pneg %p17
    %p24 = scmp.eq.s32.totalorder %s8, 1
    %p25 = por %p23, %p24
    %p26 = scmp.ne.s32.totalorder %s18, %s21
    %p27 = scmp.eq.s32.totalorder %s8, 0
    %p28 = por %p26, %p27
    %p29 = scmp.ne.s32.totalorder %s18, %s21
    %p30 = scmp.eq.s32.totalorder %s13, 1
    %p31 = por %p29, %p30
    %p32 = scmp.ne.s32.totalorder %s21, %s22
    %p33 = scmp.eq.s32.totalorder %s13, 0
    %p34 = por %p32, %p33
    %p35 = scmp.ne.s32.totalorder %s21, %s22
    %p36 = scmp.eq.s32.totalorder %s14, 1
    %p37 = por %p35, %p36
    %p39 = scmp.ne.s32.totalorder %s22, %s38
    %p40 = scmp.eq.s32.totalorder %s14, 0
    %p41 = por %p39, %p40
    %s42 = ssub.s32 %s8, %s15
    %p43 = scmp.eq.s32.totalorder %s42, 0
    %s45 = sadd.s32 %s44, 1
    %s46 = scalar_select %p43, %s44, %s45
    %p49 = pneg %p43
    %p50 = scmp.eq.s32.totalorder %s8, 1
    %p51 = por %p49, %p50
    %p52 = scmp.ne.s32.totalorder %s44, %s47
    %p53 = scmp.eq.s32.totalorder %s8, 0
    %p54 = por %p52, %p53
    %p55 = scmp.ne.s32.totalorder %s44, %s47
    %p56 = scmp.eq.s32.totalorder %s13, 1
    %p57 = por %p55, %p56
    %p58 = scmp.ne.s32.totalorder %s47, %s48
    %p59 = scmp.eq.s32.totalorder %s13, 0
    %p60 = por %p58, %p59
    %p61 = scmp.ne.s32.totalorder %s47, %s48
    %p62 = scmp.eq.s32.totalorder %s14, 1
    %p63 = por %p61, %p62
    %p65 = scmp.ne.s32.totalorder %s48, %s64
    %p66 = scmp.eq.s32.totalorder %s14, 0
    %p67 = por %p65, %p66
    %s68 = ssub.s32 %s8, %s15
    %p69 = scmp.eq.s32.totalorder %s68, 0
    %s71 = sadd.s32 %s70, 1
    %s72 = scalar_select %p69, %s70, %s71
    %p75 = pneg %p69
    %p76 = scmp.eq.s32.totalorder %s8, 1
    %p77 = por %p75, %p76
    %p78 = scmp.ne.s32.totalorder %s70, %s73
    %p79 = scmp.eq.s32.totalorder %s8, 0
    %p80 = por %p78, %p79
    %p81 = scmp.ne.s32.totalorder %s70, %s73
    %p82 = scmp.eq.s32.totalorder %s13, 1
    %p83 = por %p81, %p82
    %p84 = scmp.ne.s32.totalorder %s73, %s74
    %p85 = scmp.eq.s32.totalorder %s13, 0
    %p86 = por %p84, %p85
    %p87 = scmp.ne.s32.totalorder %s73, %s74
    %p88 = scmp.eq.s32.totalorder %s14, 1
    %p89 = por %p87, %p88
    %p91 = scmp.ne.s32.totalorder %s74, %s90
    %p92 = scmp.eq.s32.totalorder %s14, 0
    %p93 = por %p91, %p92
    %p94 = scmp.le.s32.totalorder 1, %s8
    %p95 = scmp.lt.s32.totalorder %s8, 3
    %p96 = pnand %p94, %p95
    %p97 = pneg %p96
    // Predicated region
    $region9: #{_lambda_.13} parent=5 // pred_check
      _
    $region10: #{_lambda_.13} parent=5 // pred_check_branch
      %99 = sbr.rel (%p96) target = $region12
    $region11: #{_lambda_.13} parent=5 // pred_region
      %s100 = ssub.s32 %s8, 1
    $region12: #{_lambda_.13} parent=5 // pred_fallthru
      _
    %p101 = scmp.lt.s32.totalorder %s8, 2
    // Predicated region
    $region13: #{_lambda_.13} parent=5 // pred_check
      %p102 = pneg %p101
    $region14: #{_lambda_.13} parent=5 // pred_check_branch
      %104 = sbr.rel (%p102) target = $region16
    $region15: #{_lambda_.13} parent=5 // pred_region
      // Predicated region
      $region17: #{_lambda_.13} parent=15 // pred_check
        %p105 = pneg %p28
      $region18: #{_lambda_.13} parent=15 // pred_check_branch
        %107 = sbr.rel (%p105) target = $region20
      $region19: #{_lambda_.13} parent=15 // pred_region
        %p108 = scmp.lt.s32.totalorder %s8, 1
        %s109 = scalar_select %p108, %s8, 1
        %s110 = scalar_lea.vmem %s0, %s109
      $region20: #{_lambda_.13} parent=15 // pred_fallthru
        _
      // Predicated region
      $region21: #{_lambda_.13} parent=15 // pred_check
        %p111 = pneg %p54
      $region22: #{_lambda_.13} parent=15 // pred_check_branch
        %113 = sbr.rel (%p111) target = $region24
      $region23: #{_lambda_.13} parent=15 // pred_region
        %p114 = scmp.lt.s32.totalorder %s8, 1
        %s115 = scalar_select %p114, %s8, 1
        %s116 = smul.addr %s115, 16
        %s117 = smul.addr %s116, 8
        %s118 = scalar_lea.vmem %s1, %s117
      $region24: #{_lambda_.13} parent=15 // pred_fallthru
        _
    $region16: #{_lambda_.13} parent=5 // pred_fallthru
      _
    %p119 = scmp.le.s32.totalorder 1, %s8
    %p120 = scmp.lt.s32.totalorder %s8, 3
    %p121 = pnand %p119, %p120
    %p122 = pneg %p121
    // Predicated region
    $region25: #{_lambda_.13} parent=5 // pred_check
      _
    $region26: #{_lambda_.13} parent=5 // pred_check_branch
      %124 = sbr.rel (%p121) target = $region28
    $region27: #{_lambda_.13} parent=5 // pred_region
      %s125 = ssub.s32 %s8, 1
      %p126 = scmp.lt.s32.totalorder %s13, 1
      %s127 = scalar_select %p126, %s13, 1
      %s128 = scalar_lea.vmem %s0, %s127
      %p129 = pneg %p34
      %p130 = pneg %p31
      %p131 = scmp.lt.s32.totalorder %s13, 1
      %s132 = scalar_select %p131, %s13, 1
      %s133 = smul.addr %s132, 16
      %s134 = smul.addr %s133, 8
      %s135 = scalar_lea.vmem %s1, %s134
      %p136 = pneg %p60
      %p137 = pneg %p57
      %p138 = pneg %p86
      %p139 = pneg %p83
      %p140 = scmp.lt.s32.totalorder %s13, 1
      %s141 = scalar_select %p140, %s13, 1
      %s142 = scalar_lea.vmem %s2, %s141
      %p143 = scmp.lt.s32.totalorder %s13, 1
      %s144 = scalar_select %p143, %s13, 1
      %s145 = scalar_lea.vmem %s0, %s144
      %p146 = scmp.lt.s32.totalorder %s13, 1
      %s147 = scalar_select %p146, %s13, 1
      %s148 = smul.addr %s147, 16
      %s149 = smul.addr %s148, 8
      %s150 = scalar_lea.vmem %s1, %s149
      %p151 = scmp.lt.s32.totalorder %s13, 1
      %s152 = scalar_select %p151, %s13, 1
      %s153 = scalar_lea.vmem %s2, %s152
      %v154 = vld [vmem:[%s145] sm:$0x1]
      %v155 = vld [vmem:[%s150] sm:$0xff]
      %v156 = vld [vmem:[%s150 + $0x8] sm:$0xff]
      %v157 = vld [vmem:[%s150 + $0x10] sm:$0xff]
      %v158 = vld [vmem:[%s150 + $0x18] sm:$0xff]
      %v159 = vld [vmem:[%s150 + $0x20] sm:$0xff]
      %v160 = vld [vmem:[%s150 + $0x28] sm:$0xff]
      %v161 = vld [vmem:[%s150 + $0x30] sm:$0xff]
      %v162 = vld [vmem:[%s150 + $0x38] sm:$0xff]
      %v163 = vld [vmem:[%s150 + $0x40] sm:$0xff]
      %v164 = vld [vmem:[%s150 + $0x48] sm:$0xff]
      %v165 = vld [vmem:[%s150 + $0x50] sm:$0xff]
      %v166 = vld [vmem:[%s150 + $0x58] sm:$0xff]
      %v167 = vld [vmem:[%s150 + $0x60] sm:$0xff]
      %v168 = vld [vmem:[%s150 + $0x68] sm:$0xff]
      %v169 = vld [vmem:[%s150 + $0x70] sm:$0xff]
      %v170 = vld [vmem:[%s150 + $0x78] sm:$0xff]
      %171 = vmatprep.subr.mxu0 0.0
      %172 = vmatpush1.msra.mxu0 %v155
      %173 = vmatprep.subr.mxu0 0.0
      %174 = vmatpush1.msra.mxu0 %v156
      %175 = vmatprep.subr.mxu0 0.0
      %176 = vmatpush1.msra.mxu0 %v157
      %177 = vmatprep.subr.mxu0 0.0
      %178 = vmatpush1.msra.mxu0 %v158
      %179 = vmatprep.subr.mxu0 0.0
      %180 = vmatpush1.msra.mxu0 %v159
      %181 = vmatprep.subr.mxu0 0.0
      %182 = vmatpush1.msra.mxu0 %v160
      %183 = vmatprep.subr.mxu0 0.0
      %184 = vmatpush1.msra.mxu0 %v161
      %185 = vmatprep.subr.mxu0 0.0
      %186 = vmatpush1.msra.mxu0 %v162
      %187 = vmatprep.subr.mxu0 0.0
      %188 = vmatpush1.msra.mxu0 %v163
      %189 = vmatprep.subr.mxu0 0.0
      %190 = vmatpush1.msra.mxu0 %v164
      %191 = vmatprep.subr.mxu0 0.0
      %192 = vmatpush1.msra.mxu0 %v165
      %193 = vmatprep.subr.mxu0 0.0
      %194 = vmatpush1.msra.mxu0 %v166
      %195 = vmatprep.subr.mxu0 0.0
      %196 = vmatpush1.msra.mxu0 %v167
      %197 = vmatprep.subr.mxu0 0.0
      %198 = vmatpush1.msra.mxu0 %v168
      %199 = vmatprep.subr.mxu0 0.0
      %200 = vmatpush1.msra.mxu0 %v169
      %201 = vmatprep.subr.mxu0 0.0
      %202 = vmatpush1.msra.mxu0 %v170
      %203 = vmatprep.subr.mxu0 0.0
      %204 = vmatpush1.msra.mxu0 0.0
      %205 = vmatprep.subr.mxu0 0.0
      %206 = vmatpush1.msra.mxu0 0.0
      %207 = vmatprep.subr.mxu0 0.0
      %208 = vmatpush1.msra.mxu0 0.0
      %209 = vmatprep.subr.mxu0 0.0
      %210 = vmatpush1.msra.mxu0 0.0
      %211 = vmatprep.subr.mxu0 0.0
      %212 = vmatpush1.msra.mxu0 0.0
      %213 = vmatprep.subr.mxu0 0.0
      %214 = vmatpush1.msra.mxu0 0.0
      %215 = vmatprep.subr.mxu0 0.0
      %216 = vmatpush1.msra.mxu0 0.0
      %217 = vmatprep.subr.mxu0 0.0
      %218 = vmatpush1.msra.mxu0 0.0
      %219 = vmatprep.subr.mxu0 0.0
      %220 = vmatpush1.msra.mxu0 0.0
      %221 = vmatprep.subr.mxu0 0.0
      %222 = vmatpush1.msra.mxu0 0.0
      %223 = vmatprep.subr.mxu0 0.0
      %224 = vmatpush1.msra.mxu0 0.0
      %225 = vmatprep.subr.mxu0 0.0
      %226 = vmatpush1.msra.mxu0 0.0
      %227 = vmatprep.subr.mxu0 0.0
      %228 = vmatpush1.msra.mxu0 0.0
      %229 = vmatprep.subr.mxu0 0.0
      %230 = vmatpush1.msra.mxu0 0.0
      %231 = vmatprep.subr.mxu0 0.0
      %232 = vmatpush1.msra.mxu0 0.0
      %233 = vmatprep.subr.mxu0 0.0
      %234 = vmatpush1.msra.mxu0 0.0
      %235 = vmatprep.mubr.f32.mxu0 0.0
      %236 = vmatmul.mubr.f32.gmra.mrb[0].mxu0 %v154
      %v237 = vpop.f32.mrb[0].mxu0
      %v238 = vadd.f32 0.0, %v237
      %v239 = vpop.f32.mrb[0].mxu0
      %240 = vdwg.mxu0
      %v241 = vmul.f32 %v154, %v154
      %vm242 = vcmask 1040384
      %v243 = vsel %vm242, %v241, 0.0
      %244 = vadd.xlane.f32.xlu0 %v243
      %v245 = vpop.xlane.xlu0 %244
      %v246 = vrot.slane %v245, 4
      %v247 = vadd.f32 %v245, %v246
      %v248 = vrot.slane %v247, 2
      %v249 = vadd.f32 %v247, %v248
      %v250 = vrot.slane %v249, 1
      %v251 = vadd.f32 %v249, %v250
      %s252 = vtos %v251
      %v253 = vmul.f32 %v155, %v155
      %v254 = vmul.f32 %v156, %v156
      %v255 = vmul.f32 %v157, %v157
      %v256 = vmul.f32 %v158, %v158
      %v257 = vmul.f32 %v159, %v159
      %v258 = vmul.f32 %v160, %v160
      %v259 = vmul.f32 %v161, %v161
      %v260 = vmul.f32 %v162, %v162
      %v261 = vmul.f32 %v163, %v163
      %v262 = vmul.f32 %v164, %v164
      %v263 = vmul.f32 %v165, %v165
      %v264 = vmul.f32 %v166, %v166
      %v265 = vmul.f32 %v167, %v167
      %v266 = vmul.f32 %v168, %v168
      %v267 = vmul.f32 %v169, %v169
      %v268 = vmul.f32 %v170, %v170
      %v269 = vadd.f32 %v253, %v254
      %v270 = vadd.f32 %v269, %v255
      %v271 = vadd.f32 %v270, %v256
      %v272 = vadd.f32 %v271, %v257
      %v273 = vadd.f32 %v272, %v258
      %v274 = vadd.f32 %v273, %v259
      %v275 = vadd.f32 %v274, %v260
      %v276 = vadd.f32 %v275, %v261
      %v277 = vadd.f32 %v276, %v262
      %v278 = vadd.f32 %v277, %v263
      %v279 = vadd.f32 %v278, %v264
      %v280 = vadd.f32 %v279, %v265
      %v281 = vadd.f32 %v280, %v266
      %v282 = vadd.f32 %v281, %v267
      %v283 = vadd.f32 %v282, %v268
      %v284 = vrot.slane %v283, 4
      %v285 = vadd.f32 %v283, %v284
      %v286 = vrot.slane %v285, 2
      %v287 = vadd.f32 %v285, %v286
      %v288 = vrot.slane %v287, 1
      %v289 = vadd.f32 %v287, %v288
      %v290 = vstv %s252
      %v291 = vrsqrt.pop %v290
      %v292 = vmul.f32 %v290, %v291
      %vm293 = vcmp.eq.f32.partialorder %v290, inf
      %v294 = vsel %vm293, %v290, %v292
      %vm295 = vcmp.eq.f32.partialorder %v290, 0.0
      %v296 = vand.u32 %v290, 2147483648
      %v297 = vsel %vm295, %v296, %v294
      %s298 = vtos %v297
      %v299 = vrsqrt.pop %v289
      %v300 = vmul.f32 %v289, %v299
      %vm301 = vcmp.eq.f32.partialorder %v289, inf
      %v302 = vsel %vm301, %v289, %v300
      %vm303 = vcmp.eq.f32.partialorder %v289, 0.0
      %v304 = vand.u32 %v289, 2147483648
      %v305 = vsel %vm303, %v304, %v302
      %v306 = vstv %s298
      %v307 = vmul.f32 %v306, %v305
      %v308 = vmax.f32 %v307, 1e-08
      %v309 = vrcp.pop %v308
      %v310 = vmul.f32 %v238, %v309
      %311 = vst [vmem:[%s153] sm:$0x1] %v310
      %p312 = scmp.lt.s32.totalorder %s13, 1
      %s313 = scalar_select %p312, %s13, 1
      %s314 = scalar_lea.vmem %s2, %s313
      // Predicated region
      $region29: #{_lambda_.13} parent=27 // pred_check
        %p315 = pneg %p83
      $region30: #{_lambda_.13} parent=27 // pred_check_branch
        %317 = sbr.rel (%p315) target = $region32
      $region31: #{_lambda_.13} parent=27 // pred_region
        _
      $region32: #{_lambda_.13} parent=27 // pred_fallthru
        _
    $region28: #{_lambda_.13} parent=5 // pred_fallthru
      _
    %p318 = scmp.le.s32.totalorder 2, %s8
    // Predicated region
    $region33: #{_lambda_.13} parent=5 // pred_check
      %p319 = pneg %p318
    $region34: #{_lambda_.13} parent=5 // pred_check_branch
      %321 = sbr.rel (%p319) target = $region36
    $region35: #{_lambda_.13} parent=5 // pred_region
      %s322 = ssub.s32 %s8, 2
      // Predicated region
      $region37: #{_lambda_.13} parent=35 // pred_check
        %p323 = pneg %p89
      $region38: #{_lambda_.13} parent=35 // pred_check_branch
        %325 = sbr.rel (%p323) target = $region40
      $region39: #{_lambda_.13} parent=35 // pred_region
        %p326 = scmp.lt.s32.totalorder %s14, 1
        %s327 = scalar_select %p326, %s14, 1
        %s328 = scalar_lea.vmem %s2, %s327
      $region40: #{_lambda_.13} parent=35 // pred_fallthru
        _
    $region36: #{_lambda_.13} parent=5 // pred_fallthru
      _
  $region6: #{_lambda_.13} parent=0 // loop_footer
    %s12 = sadd.s32 1, %s8
  $region7: #{_lambda_.13} parent=0 // loop_footer_branch
    %7 = sbr.rel target = $region3
  $region8: #{_lambda_.13} parent=0 // loop_exit
    _

</llo_original>
